<compile_context>
chip_gen: v5e
topology: v5e:2x2
jax: 0.10.0
libtpu: 0.0.40
codegen_flags: <defaults>
</compile_context>

<pallas_src>
import functools
import math

import jax
import jax.numpy as jnp
from jax.experimental import pallas as pl
from jax.experimental.pallas import tpu as pltpu

LN_EPS = 1e-5
FAVOR_EPS = 1e-4
NEG_BIG = -1e30


# ---------------------------- shared in-kernel helpers ----------------------------

def _layernorm(z, gamma, beta):
    mean = jnp.mean(z, axis=-1, keepdims=True)
    var = jnp.mean(jnp.square(z - mean), axis=-1, keepdims=True)   # biased var, like torch LN
    return (z - mean) * jax.lax.rsqrt(var + LN_EPS) * gamma + beta


# ---------------------------- Pallas kernels ----------------------------

def _cross_attn_ln_kernel(x_ref, ctx_ref, wq_ref, wkv_ref, proj_ref, wo_ref,
                          bo_ref, g_ref, b_ref, o_ref, *, heads, dim_head, m_real):
    """Fused nCrossAttention + residual add + LayerNorm for one batch element."""
    x = x_ref[...]                        # (Nq, D)  f32 — residual & q source
    ctx = ctx_ref[...]                    # (Nk, D)  f32 — k/v source
    wq = wq_ref[...]                      # (D, inner)     bf16
    wkv = wkv_ref[...]                    # (D, 2*inner)   bf16
    proj = proj_ref[...]                  # (M_pad, dh)    bf16 (rows >= m_real are zero)
    inner = heads * dim_head
    m_pad = proj.shape[0]

    # Fused projections (bf16 MXU inputs, f32 accumulation).
    q = jnp.dot(x.astype(jnp.bfloat16), wq, preferred_element_type=jnp.float32)       # (Nq, inner)
    kv = jnp.dot(ctx.astype(jnp.bfloat16), wkv, preferred_element_type=jnp.float32)   # (Nk, 2*inner)

    dn = dim_head ** -0.25                # data_normalizer
    ratio = m_real ** -0.5                # ratio uses the REAL feature count
    feat_mask = jax.lax.broadcasted_iota(jnp.int32, (1, m_pad), 1) < m_real           # (1, M_pad)
    mask_f = feat_mask.astype(jnp.float32)

    head_outs = []
    for h in range(heads):                # static loop, traced once per head
        qh = q[:, h * dim_head:(h + 1) * dim_head]                       # (Nq, dh) f32
        kh = kv[:, h * dim_head:(h + 1) * dim_head]                      # (Nk, dh) f32
        vh = kv[:, inner + h * dim_head: inner + (h + 1) * dim_head]     # (Nk, dh) f32

        q_dash = jax.lax.dot_general((qh * dn).astype(jnp.bfloat16), proj,
                                     (((1,), (1,)), ((), ())),
                                     preferred_element_type=jnp.float32)  # (Nq, M_pad)
        k_dash = jax.lax.dot_general((kh * dn).astype(jnp.bfloat16), proj,
                                     (((1,), (1,)), ((), ())),
                                     preferred_element_type=jnp.float32)  # (Nk, M_pad)

        q_diag = jnp.sum(qh * qh, axis=-1, keepdims=True) * (0.5 * dn * dn)   # (Nq, 1)
        k_diag = jnp.sum(kh * kh, axis=-1, keepdims=True) * (0.5 * dn * dn)   # (Nk, 1)

        # softmax_kernel maxima over REAL features only.
        q_max = jnp.max(jnp.where(feat_mask, q_dash, NEG_BIG), axis=-1, keepdims=True)    # (Nq, 1)
        k_max = jnp.max(jnp.where(feat_mask, k_dash, NEG_BIG), axis=(0, 1), keepdims=True)  # (1, 1)

        # Padded feature columns forced to exactly zero (so they don't pollute k_sum / ctx / d).
        q_prime = mask_f * (ratio * (jnp.exp(jnp.where(feat_mask, q_dash - q_diag - q_max, 0.0))
                                     + FAVOR_EPS))                           # (Nq, M_pad)
        k_prime = mask_f * (ratio * (jnp.exp(jnp.where(feat_mask, k_dash - k_diag - k_max, 0.0))
                                     + FAVOR_EPS))                           # (Nk, M_pad)

        # Non-causal linear attention.
        k_sum = jnp.sum(k_prime, axis=0, keepdims=True)                       # (1, M_pad)
        d = jnp.sum(q_prime * k_sum, axis=-1, keepdims=True)                  # (Nq, 1)  VPU+XLU
        d_inv = pl.reciprocal(d, approx=True)                                 # EUP slot

        ctx_mat = jax.lax.dot_general(k_prime.astype(jnp.bfloat16), vh.astype(jnp.bfloat16),
                                      (((0,), (0,)), ((), ())),
                                      preferred_element_type=jnp.float32)     # (M_pad, dh)
        out_h = jnp.dot(q_prime.astype(jnp.bfloat16), ctx_mat.astype(jnp.bfloat16),
                        preferred_element_type=jnp.float32) * d_inv           # (Nq, dh)
        head_outs.append(out_h)

    attn = jnp.concatenate(head_outs, axis=-1)                                # (Nq, inner) = 'b n (h d)'
    y = jnp.dot(attn.astype(jnp.bfloat16), wo_ref[...],
                preferred_element_type=jnp.float32) + bo_ref[...]             # to_out (+ bias)

    # Fused residual add + LayerNorm epilogue.
    z = x + y
    o_ref[...] = _layernorm(z, g_ref[...], b_ref[...]).astype(o_ref.dtype)


def _mlp_ln_kernel(x_ref, w1_ref, b1_ref, w2_ref, b2_ref, g_ref, b_ref, o_ref):
    """Fused MLPBlock (lin1 -> GELU -> lin2) + residual add + LayerNorm for one row tile."""
    x = x_ref[...]                                                            # (TR, D) f32
    h = jnp.dot(x.astype(jnp.bfloat16), w1_ref[...],
                preferred_element_type=jnp.float32) + b1_ref[...]
    # exact GELU (nn.GELU() default): 0.5 * x * (1 + erf(x / sqrt(2))), in f32
    h = 0.5 * h * (1.0 + jax.lax.erf(h * (2.0 ** -0.5)))
    y = jnp.dot(h.astype(jnp.bfloat16), w2_ref[...],
                preferred_element_type=jnp.float32) + b2_ref[...]
    z = x + y
    o_ref[...] = _layernorm(z, g_ref[...], b_ref[...]).astype(o_ref.dtype)


# ---------------------------- Pallas wrappers ----------------------------

def pallas_cross_attn_block(x, ctx, p, ln_g, ln_b):
    """query <- LayerNorm(query + nCrossAttention(query, context)) in one pallas_call."""
    B, Nq, D = x.shape
    Nk = ctx.shape[1]
    H, Dh = p["heads"], p["dim_head"]
    inner = H * Dh
    M_pad = p["proj"].shape[0]
    m_real = p["nb_features"]

    wq = p["wq"].astype(jnp.bfloat16)
    wkv = jnp.concatenate([p["wk"], p["wv"]], axis=1).astype(jnp.bfloat16)    # fused K|V weight
    proj = p["proj"].astype(jnp.bfloat16)
    wo = p["wo"].astype(jnp.bfloat16)
    bo = p["bo"].reshape(1, D)
    gamma = ln_g.reshape(1, D)
    beta = ln_b.reshape(1, D)

    kernel = functools.partial(_cross_attn_ln_kernel, heads=H, dim_head=Dh, m_real=m_real)

    flops = 2 * B * (Nq * D * inner + Nk * D * 2 * inner
                     + H * (Nq * Dh * M_pad + Nk * Dh * M_pad
                            + Nk * M_pad * Dh + Nq * M_pad * Dh)
                     + Nq * inner * D)
    transcendentals = B * H * (Nq + Nk) * M_pad
    bytes_accessed = (4 * B * D * (2 * Nq + Nk)
                      + B * 2 * (wq.size + wkv.size + proj.size + wo.size)
                      + 4 * 3 * D)

    return pl.pallas_call(
        kernel,
        out_shape=jax.ShapeDtypeStruct((B, Nq, D), jnp.float32),
        grid=(B,),
        in_specs=[
            pl.BlockSpec((None, Nq, D), lambda b: (b, 0, 0)),
            pl.BlockSpec((None, Nk, D), lambda b: (b, 0, 0)),
            pl.BlockSpec((D, inner), lambda b: (0, 0)),
            pl.BlockSpec((D, 2 * inner), lambda b: (0, 0)),
            pl.BlockSpec((M_pad, Dh), lambda b: (0, 0)),
            pl.BlockSpec((inner, D), lambda b: (0, 0)),
            pl.BlockSpec((1, D), lambda b: (0, 0)),
            pl.BlockSpec((1, D), lambda b: (0, 0)),
            pl.BlockSpec((1, D), lambda b: (0, 0)),
        ],
        out_specs=pl.BlockSpec((None, Nq, D), lambda b: (b, 0, 0)),
        compiler_params=pltpu.CompilerParams(dimension_semantics=("parallel",)),
        cost_estimate=pl.CostEstimate(flops=int(flops),
                                      transcendentals=int(transcendentals),
                                      bytes_accessed=int(bytes_accessed)),
    )(x, ctx, wq, wkv, proj, wo, bo, gamma, beta)


def _pick_row_tile(rows):
    for tr in (512, 256, 128, 64, 32, 16, 8):
        if rows % tr == 0:
            return tr
    return rows


def pallas_mlp_ln(x, mlp_params, ln_g, ln_b):
    """x <- LayerNorm(x + MLPBlock(x)) in one row-tiled pallas_call."""
    B, N, D = x.shape
    w1, b1, w2, b2 = mlp_params
    Dm = w1.shape[1]
    rows = B * N
    tr = _pick_row_tile(rows)
    x2 = x.reshape(rows, D)

    flops = 2 * rows * D * Dm * 2
    transcendentals = rows * Dm
    bytes_accessed = 4 * rows * D * 2 + 2 * (w1.size + w2.size) + 4 * (Dm + 3 * D)

    out = pl.pallas_call(
        _mlp_ln_kernel,
        out_shape=jax.ShapeDtypeStruct((rows, D), jnp.float32),
        grid=(rows // tr,),
        in_specs=[pl.BlockSpec((tr, D), lambda i: (i, 0)),
                  pl.BlockSpec((D, Dm), lambda i: (0, 0)),
                  pl.BlockSpec((1, Dm), lambda i: (0, 0)),
                  pl.BlockSpec((Dm, D), lambda i: (0, 0)),
                  pl.BlockSpec((1, D), lambda i: (0, 0)),
                  pl.BlockSpec((1, D), lambda i: (0, 0)),
                  pl.BlockSpec((1, D), lambda i: (0, 0))],
        out_specs=pl.BlockSpec((tr, D), lambda i: (i, 0)),
        compiler_params=pltpu.CompilerParams(dimension_semantics=("parallel",)),
        cost_estimate=pl.CostEstimate(flops=int(flops),
                                      transcendentals=int(transcendentals),
                                      bytes_accessed=int(bytes_accessed)),
    )(x2, w1.astype(jnp.bfloat16), b1.reshape(1, Dm), w2.astype(jnp.bfloat16),
      b2.reshape(1, D), ln_g.reshape(1, D), ln_b.reshape(1, D))
    return out.reshape(B, N, D)


# ---------------------------- Module-level glue ----------------------------

def cross_update_block_forward(query, context, params):
    # query <- norm0(query + cross_attn(query, context)); query <- norm1(query + mlp0(query))
    query = pallas_cross_attn_block(query, context, params["attn0"],
                                    params["ln0_g"], params["ln0_b"])
    query = pallas_mlp_ln(query, params["mlp0"], params["ln1_g"], params["ln1_b"])
    # bidirectional branch
    context = pallas_cross_attn_block(context, query, params["attn1"],
                                      params["ln2_g"], params["ln2_b"])
    context = pallas_mlp_ln(context, params["mlp1"], params["ln3_g"], params["ln3_b"])
    return query, context, None, None


# ---------------------------- Deterministic params ----------------------------

def _linear_w(key, din, dout):
    return jax.random.normal(key, (din, dout), jnp.float32) / math.sqrt(din)


def make_attn_params(key, dim, heads, dim_head, nb_features, nb_features_pad):
    inner = heads * dim_head
    kq, kk, kv, ko, kb, kp = jax.random.split(key, 6)
    # FAVOR+ projection; padded rows are zero (padded feature columns masked out in-kernel).
    proj = jnp.zeros((nb_features_pad, dim_head), jnp.float32)
    proj = proj.at[:nb_features].set(
        jax.random.normal(kp, (nb_features, dim_head), jnp.float32))
    return {
        "heads": heads,
        "dim_head": dim_head,
        "nb_features": nb_features,
        "wq": _linear_w(kq, dim, inner),
        "wk": _linear_w(kk, dim, inner),
        "wv": _linear_w(kv, dim, inner),
        "wo": _linear_w(ko, inner, dim),
        "bo": 0.01 * jax.random.normal(kb, (dim,), jnp.float32),
        "proj": proj,
    }


def make_mlp_params(key, dim, mlp_dim):
    k1, k2, k3, k4 = jax.random.split(key, 4)
    return (_linear_w(k1, dim, mlp_dim),
            0.01 * jax.random.normal(k2, (mlp_dim,), jnp.float32),
            _linear_w(k3, mlp_dim, dim),
            0.01 * jax.random.normal(k4, (dim,), jnp.float32))


def make_params(key, embedding_dim, n_head, mlp_dim):
    dim_head = 64                                           # performer default (see header note)
    nb_features = int(dim_head * math.log(dim_head))        # = 266
    nb_features_pad = ((nb_features + 127) // 128) * 128    # = 384 (lane-aligned)
    keys = jax.random.split(key, 4)
    p = {
        "attn0": make_attn_params(keys[0], embedding_dim, n_head, dim_head,
                                  nb_features, nb_features_pad),
        "attn1": make_attn_params(keys[1], embedding_dim, n_head, dim_head,
                                  nb_features, nb_features_pad),
        "mlp0": make_mlp_params(keys[2], embedding_dim, mlp_dim),
        "mlp1": make_mlp_params(keys[3], embedding_dim, mlp_dim),
    }
    for i in range(4):
        p[f"ln{i}_g"] = jnp.ones((embedding_dim,), jnp.float32)
        p[f"ln{i}_b"] = jnp.zeros((embedding_dim,), jnp.float32)
    return p


# ---------------------------- Main ----------------------------

if __name__ == "__main__":
    B, Nq, Nc = 2, 8, 16
    embedding_dim, n_head = 32, 2
    mlp_dim = embedding_dim * 2

    root = jax.random.PRNGKey(0)
    k_params, k_q, k_c = jax.random.split(root, 3)
    params = make_params(k_params, embedding_dim, n_head, mlp_dim)
    query = jax.random.normal(k_q, (B, Nq, embedding_dim), jnp.float32)
    context = jax.random.normal(k_c, (B, Nc, embedding_dim), jnp.float32)

    q_out, c_out, _, _ = cross_update_block_forward(query, context, params)
    jax.block_until_ready(q_out)
    jax.block_until_ready(c_out)

    assert q_out.shape == (B, Nq, embedding_dim)
    assert c_out.shape == (B, Nc, embedding_dim)
    assert bool(jnp.all(jnp.isfinite(q_out))) and bool(jnp.all(jnp.isfinite(c_out)))
    print("KERNEL_OK")
</pallas_src>

<mosaic_0001>
module attributes {stable_mosaic.version = 11 : i64} {
  func.func @_cross_attn_ln_kernel(%arg0: i32, %arg1: memref<1x8x32xf32, #tpu.memory_space<vmem>>, %arg2: memref<1x16x32xf32, #tpu.memory_space<vmem>>, %arg3: memref<32x128xbf16, #tpu.memory_space<vmem>>, %arg4: memref<32x256xbf16, #tpu.memory_space<vmem>>, %arg5: memref<384x64xbf16, #tpu.memory_space<vmem>>, %arg6: memref<128x32xbf16, #tpu.memory_space<vmem>>, %arg7: memref<1x32xf32, #tpu.memory_space<vmem>>, %arg8: memref<1x32xf32, #tpu.memory_space<vmem>>, %arg9: memref<1x32xf32, #tpu.memory_space<vmem>>, %arg10: memref<1x8x32xf32, #tpu.memory_space<vmem>>) attributes {dimension_semantics = [#tpu.dimension_semantics<parallel>], iteration_bounds = array<i64: 2>, scalar_prefetch = 0 : i64, scratch_operands = 0 : i64, tpu.core_type = #tpu.core_type<tc>, window_params = [{transform_indices = @transform_0, window_bounds = array<i64: 1, 8, 32>}, {transform_indices = @transform_1, window_bounds = array<i64: 1, 16, 32>}, {pipeline_mode = #tpu.pipeline_mode<synchronous>, transform_indices = @transform_2, window_bounds = array<i64: 32, 128>}, {pipeline_mode = #tpu.pipeline_mode<synchronous>, transform_indices = @transform_3, window_bounds = array<i64: 32, 256>}, {pipeline_mode = #tpu.pipeline_mode<synchronous>, transform_indices = @transform_4, window_bounds = array<i64: 384, 64>}, {pipeline_mode = #tpu.pipeline_mode<synchronous>, transform_indices = @transform_5, window_bounds = array<i64: 128, 32>}, {pipeline_mode = #tpu.pipeline_mode<synchronous>, transform_indices = @transform_6, window_bounds = array<i64: 1, 32>}, {pipeline_mode = #tpu.pipeline_mode<synchronous>, transform_indices = @transform_7, window_bounds = array<i64: 1, 32>}, {pipeline_mode = #tpu.pipeline_mode<synchronous>, transform_indices = @transform_8, window_bounds = array<i64: 1, 32>}, {transform_indices = @transform_9, window_bounds = array<i64: 1, 8, 32>}]} {
    %c0 = arith.constant 0 : index
    %c0_0 = arith.constant 0 : index
    %c0_1 = arith.constant 0 : index
    %0 = vector.load %arg1[%c0, %c0_0, %c0_1] : memref<1x8x32xf32, #tpu.memory_space<vmem>>, vector<1x8x32xf32>
    %1 = vector.shape_cast %0 : vector<1x8x32xf32> to vector<8x32xf32>
    %c0_2 = arith.constant 0 : index
    %c0_3 = arith.constant 0 : index
    %c0_4 = arith.constant 0 : index
    %2 = vector.load %arg2[%c0_2, %c0_3, %c0_4] : memref<1x16x32xf32, #tpu.memory_space<vmem>>, vector<1x16x32xf32>
    %3 = vector.shape_cast %2 : vector<1x16x32xf32> to vector<16x32xf32>
    %c0_5 = arith.constant 0 : index
    %c0_6 = arith.constant 0 : index
    %4 = vector.load %arg3[%c0_5, %c0_6] : memref<32x128xbf16, #tpu.memory_space<vmem>>, vector<32x128xbf16>
    %c0_7 = arith.constant 0 : index
    %c0_8 = arith.constant 0 : index
    %5 = vector.load %arg4[%c0_7, %c0_8] : memref<32x256xbf16, #tpu.memory_space<vmem>>, vector<32x256xbf16>
    %c0_9 = arith.constant 0 : index
    %c0_10 = arith.constant 0 : index
    %6 = vector.load %arg5[%c0_9, %c0_10] : memref<384x64xbf16, #tpu.memory_space<vmem>>, vector<384x64xbf16>
    %7 = arith.truncf %1 : vector<8x32xf32> to vector<8x32xbf16>
    %cst = arith.constant dense<0.000000e+00> : vector<8x128xf32>
    %8 = tpu.matmul %7, %4, %cst {dimension_numbers = #tpu.dot_dimension_numbers<[1], [0], [0], [1], [0, 0, 1, 1], [], []>} : vector<8x32xbf16>, vector<32x128xbf16>, vector<8x128xf32> -> vector<8x128xf32>
    %9 = arith.truncf %3 : vector<16x32xf32> to vector<16x32xbf16>
    %cst_11 = arith.constant dense<0.000000e+00> : vector<16x256xf32>
    %10 = tpu.matmul %9, %5, %cst_11 {dimension_numbers = #tpu.dot_dimension_numbers<[1], [0], [0], [1], [0, 0, 1, 1], [], []>} : vector<16x32xbf16>, vector<32x256xbf16>, vector<16x256xf32> -> vector<16x256xf32>
    %11 = tpu.iota {dimensions = array<i32: 1>} : vector<1x384xi32>
    %c266_i32 = arith.constant 266 : i32
    %12 = vector.broadcast %c266_i32 : i32 to vector<1x384xi32>
    %13 = arith.cmpi slt, %11, %12 : vector<1x384xi32>
    %14 = arith.extui %13 : vector<1x384xi1> to vector<1x384xi32>
    %15 = arith.sitofp %14 : vector<1x384xi32> to vector<1x384xf32>
    %16 = vector.extract_strided_slice %8 {offsets = [0, 0], sizes = [8, 64], strides = [1, 1]} : vector<8x128xf32> to vector<8x64xf32>
    %17 = vector.extract_strided_slice %10 {offsets = [0, 0], sizes = [16, 64], strides = [1, 1]} : vector<16x256xf32> to vector<16x64xf32>
    %18 = vector.extract_strided_slice %10 {offsets = [0, 128], sizes = [16, 64], strides = [1, 1]} : vector<16x256xf32> to vector<16x64xf32>
    %cst_12 = arith.constant 0.353553385 : f32
    %19 = vector.broadcast %cst_12 : f32 to vector<8x64xf32>
    %20 = arith.mulf %16, %19 : vector<8x64xf32>
    %21 = arith.truncf %20 : vector<8x64xf32> to vector<8x64xbf16>
    %cst_13 = arith.constant dense<0.000000e+00> : vector<8x384xf32>
    %22 = tpu.matmul %21, %6, %cst_13 {dimension_numbers = #tpu.dot_dimension_numbers<[1], [1], [0], [0], [0, 0, 1, 0], [], []>} : vector<8x64xbf16>, vector<384x64xbf16>, vector<8x384xf32> -> vector<8x384xf32>
    %cst_14 = arith.constant 0.353553385 : f32
    %23 = vector.broadcast %cst_14 : f32 to vector<16x64xf32>
    %24 = arith.mulf %17, %23 : vector<16x64xf32>
    %25 = arith.truncf %24 : vector<16x64xf32> to vector<16x64xbf16>
    %cst_15 = arith.constant dense<0.000000e+00> : vector<16x384xf32>
    %26 = tpu.matmul %25, %6, %cst_15 {dimension_numbers = #tpu.dot_dimension_numbers<[1], [1], [0], [0], [0, 0, 1, 0], [], []>} : vector<16x64xbf16>, vector<384x64xbf16>, vector<16x384xf32> -> vector<16x384xf32>
    %27 = arith.mulf %16, %16 : vector<8x64xf32>
    %cst_16 = arith.constant dense<0.000000e+00> : vector<8xf32>
    %28 = vector.multi_reduction <add>, %27, %cst_16 [1] : vector<8x64xf32> to vector<8xf32>
    %29 = vector.shape_cast %28 : vector<8xf32> to vector<8x1xf32>
    %cst_17 = arith.constant 6.250000e-02 : f32
    %30 = vector.broadcast %cst_17 : f32 to vector<8x1xf32>
    %31 = arith.mulf %29, %30 : vector<8x1xf32>
    %32 = arith.mulf %17, %17 : vector<16x64xf32>
    %cst_18 = arith.constant dense<0.000000e+00> : vector<16xf32>
    %33 = vector.multi_reduction <add>, %32, %cst_18 [1] : vector<16x64xf32> to vector<16xf32>
    %34 = vector.shape_cast %33 : vector<16xf32> to vector<16x1xf32>
    %cst_19 = arith.constant 6.250000e-02 : f32
    %35 = vector.broadcast %cst_19 : f32 to vector<16x1xf32>
    %36 = arith.mulf %34, %35 : vector<16x1xf32>
    %cst_20 = arith.constant -1.000000e+30 : f32
    %37 = vector.shape_cast %13 : vector<1x384xi1> to vector<1x384xi1>
    %38 = vector.broadcast %37 : vector<1x384xi1> to vector<8x384xi1>
    %39 = vector.broadcast %cst_20 : f32 to vector<8x384xf32>
    %40 = arith.select %38, %22, %39 : vector<8x384xi1>, vector<8x384xf32>
    %cst_21 = arith.constant dense<0xFF800000> : vector<8xf32>
    %41 = vector.multi_reduction <maximumf>, %40, %cst_21 [1] : vector<8x384xf32> to vector<8xf32>
    %42 = vector.shape_cast %41 : vector<8xf32> to vector<8x1xf32>
    %cst_22 = arith.constant -1.000000e+30 : f32
    %43 = vector.shape_cast %13 : vector<1x384xi1> to vector<1x384xi1>
    %44 = vector.broadcast %43 : vector<1x384xi1> to vector<16x384xi1>
    %45 = vector.broadcast %cst_22 : f32 to vector<16x384xf32>
    %46 = arith.select %44, %26, %45 : vector<16x384xi1>, vector<16x384xf32>
    %47 = vector.shape_cast %46 : vector<16x384xf32> to vector<1x16x384xf32>
    %cst_23 = arith.constant dense<0xFF800000> : vector<1xf32>
    %48 = vector.multi_reduction <maximumf>, %47, %cst_23 [1, 2] : vector<1x16x384xf32> to vector<1xf32>
    %49 = vector.shape_cast %48 : vector<1xf32> to vector<1x1x1xf32>
    %50 = vector.extract %49[0, 0, 0] : f32 from vector<1x1x1xf32>
    %51 = vector.broadcast %50 : f32 to vector<1x1xf32>
    %52 = vector.broadcast %31 : vector<8x1xf32> to vector<8x384xf32>
    %53 = arith.subf %22, %52 : vector<8x384xf32>
    %54 = vector.broadcast %42 : vector<8x1xf32> to vector<8x384xf32>
    %55 = arith.subf %53, %54 : vector<8x384xf32>
    %cst_24 = arith.constant 0.000000e+00 : f32
    %56 = vector.shape_cast %13 : vector<1x384xi1> to vector<1x384xi1>
    %57 = vector.broadcast %56 : vector<1x384xi1> to vector<8x384xi1>
    %58 = vector.broadcast %cst_24 : f32 to vector<8x384xf32>
    %59 = arith.select %57, %55, %58 : vector<8x384xi1>, vector<8x384xf32>
    %60 = math.exp %59 : vector<8x384xf32>
    %cst_25 = arith.constant 9.99999974E-5 : f32
    %61 = vector.broadcast %cst_25 : f32 to vector<8x384xf32>
    %62 = arith.addf %60, %61 : vector<8x384xf32>
    %cst_26 = arith.constant 0.0613139346 : f32
    %63 = vector.broadcast %cst_26 : f32 to vector<8x384xf32>
    %64 = arith.mulf %63, %62 : vector<8x384xf32>
    %65 = vector.broadcast %15 : vector<1x384xf32> to vector<8x384xf32>
    %66 = arith.mulf %65, %64 : vector<8x384xf32>
    %67 = vector.broadcast %36 : vector<16x1xf32> to vector<16x384xf32>
    %68 = arith.subf %26, %67 : vector<16x384xf32>
    %69 = vector.broadcast %51 : vector<1x1xf32> to vector<16x384xf32>
    %70 = arith.subf %68, %69 : vector<16x384xf32>
    %cst_27 = arith.constant 0.000000e+00 : f32
    %71 = vector.shape_cast %13 : vector<1x384xi1> to vector<1x384xi1>
    %72 = vector.broadcast %71 : vector<1x384xi1> to vector<16x384xi1>
    %73 = vector.broadcast %cst_27 : f32 to vector<16x384xf32>
    %74 = arith.select %72, %70, %73 : vector<16x384xi1>, vector<16x384xf32>
    %75 = math.exp %74 : vector<16x384xf32>
    %cst_28 = arith.constant 9.99999974E-5 : f32
    %76 = vector.broadcast %cst_28 : f32 to vector<16x384xf32>
    %77 = arith.addf %75, %76 : vector<16x384xf32>
    %cst_29 = arith.constant 0.0613139346 : f32
    %78 = vector.broadcast %cst_29 : f32 to vector<16x384xf32>
    %79 = arith.mulf %78, %77 : vector<16x384xf32>
    %80 = vector.broadcast %15 : vector<1x384xf32> to vector<16x384xf32>
    %81 = arith.mulf %80, %79 : vector<16x384xf32>
    %cst_30 = arith.constant dense<0.000000e+00> : vector<384xf32>
    %82 = vector.multi_reduction <add>, %81, %cst_30 [0] : vector<16x384xf32> to vector<384xf32>
    %83 = vector.shape_cast %82 : vector<384xf32> to vector<1x384xf32>
    %84 = vector.broadcast %83 : vector<1x384xf32> to vector<8x384xf32>
    %85 = arith.mulf %66, %84 : vector<8x384xf32>
    %cst_31 = arith.constant dense<0.000000e+00> : vector<8xf32>
    %86 = vector.multi_reduction <add>, %85, %cst_31 [1] : vector<8x384xf32> to vector<8xf32>
    %87 = vector.shape_cast %86 : vector<8xf32> to vector<8x1xf32>
    %88 = tpu.reciprocal %87 {approx = true} : vector<8x1xf32> -> vector<8x1xf32>
    %89 = arith.truncf %81 : vector<16x384xf32> to vector<16x384xbf16>
    %90 = arith.truncf %18 : vector<16x64xf32> to vector<16x64xbf16>
    %cst_32 = arith.constant dense<0.000000e+00> : vector<384x64xf32>
    %91 = tpu.matmul %89, %90, %cst_32 {dimension_numbers = #tpu.dot_dimension_numbers<[0], [0], [1], [1], [0, 1, 1, 1], [], []>} : vector<16x384xbf16>, vector<16x64xbf16>, vector<384x64xf32> -> vector<384x64xf32>
    %92 = arith.truncf %66 : vector<8x384xf32> to vector<8x384xbf16>
    %93 = arith.truncf %91 : vector<384x64xf32> to vector<384x64xbf16>
    %cst_33 = arith.constant dense<0.000000e+00> : vector<8x64xf32>
    %94 = tpu.matmul %92, %93, %cst_33 {dimension_numbers = #tpu.dot_dimension_numbers<[1], [0], [0], [1], [0, 0, 1, 1], [], []>} : vector<8x384xbf16>, vector<384x64xbf16>, vector<8x64xf32> -> vector<8x64xf32>
    %95 = vector.broadcast %88 : vector<8x1xf32> to vector<8x64xf32>
    %96 = arith.mulf %94, %95 : vector<8x64xf32>
    %97 = vector.extract_strided_slice %8 {offsets = [0, 64], sizes = [8, 64], strides = [1, 1]} : vector<8x128xf32> to vector<8x64xf32>
    %98 = vector.extract_strided_slice %10 {offsets = [0, 64], sizes = [16, 64], strides = [1, 1]} : vector<16x256xf32> to vector<16x64xf32>
    %99 = vector.extract_strided_slice %10 {offsets = [0, 192], sizes = [16, 64], strides = [1, 1]} : vector<16x256xf32> to vector<16x64xf32>
    %cst_34 = arith.constant 0.353553385 : f32
    %100 = vector.broadcast %cst_34 : f32 to vector<8x64xf32>
    %101 = arith.mulf %97, %100 : vector<8x64xf32>
    %102 = arith.truncf %101 : vector<8x64xf32> to vector<8x64xbf16>
    %cst_35 = arith.constant dense<0.000000e+00> : vector<8x384xf32>
    %103 = tpu.matmul %102, %6, %cst_35 {dimension_numbers = #tpu.dot_dimension_numbers<[1], [1], [0], [0], [0, 0, 1, 0], [], []>} : vector<8x64xbf16>, vector<384x64xbf16>, vector<8x384xf32> -> vector<8x384xf32>
    %cst_36 = arith.constant 0.353553385 : f32
    %104 = vector.broadcast %cst_36 : f32 to vector<16x64xf32>
    %105 = arith.mulf %98, %104 : vector<16x64xf32>
    %106 = arith.truncf %105 : vector<16x64xf32> to vector<16x64xbf16>
    %cst_37 = arith.constant dense<0.000000e+00> : vector<16x384xf32>
    %107 = tpu.matmul %106, %6, %cst_37 {dimension_numbers = #tpu.dot_dimension_numbers<[1], [1], [0], [0], [0, 0, 1, 0], [], []>} : vector<16x64xbf16>, vector<384x64xbf16>, vector<16x384xf32> -> vector<16x384xf32>
    %108 = arith.mulf %97, %97 : vector<8x64xf32>
    %cst_38 = arith.constant dense<0.000000e+00> : vector<8xf32>
    %109 = vector.multi_reduction <add>, %108, %cst_38 [1] : vector<8x64xf32> to vector<8xf32>
    %110 = vector.shape_cast %109 : vector<8xf32> to vector<8x1xf32>
    %cst_39 = arith.constant 6.250000e-02 : f32
    %111 = vector.broadcast %cst_39 : f32 to vector<8x1xf32>
    %112 = arith.mulf %110, %111 : vector<8x1xf32>
    %113 = arith.mulf %98, %98 : vector<16x64xf32>
    %cst_40 = arith.constant dense<0.000000e+00> : vector<16xf32>
    %114 = vector.multi_reduction <add>, %113, %cst_40 [1] : vector<16x64xf32> to vector<16xf32>
    %115 = vector.shape_cast %114 : vector<16xf32> to vector<16x1xf32>
    %cst_41 = arith.constant 6.250000e-02 : f32
    %116 = vector.broadcast %cst_41 : f32 to vector<16x1xf32>
    %117 = arith.mulf %115, %116 : vector<16x1xf32>
    %cst_42 = arith.constant -1.000000e+30 : f32
    %118 = vector.shape_cast %13 : vector<1x384xi1> to vector<1x384xi1>
    %119 = vector.broadcast %118 : vector<1x384xi1> to vector<8x384xi1>
    %120 = vector.broadcast %cst_42 : f32 to vector<8x384xf32>
    %121 = arith.select %119, %103, %120 : vector<8x384xi1>, vector<8x384xf32>
    %cst_43 = arith.constant dense<0xFF800000> : vector<8xf32>
    %122 = vector.multi_reduction <maximumf>, %121, %cst_43 [1] : vector<8x384xf32> to vector<8xf32>
    %123 = vector.shape_cast %122 : vector<8xf32> to vector<8x1xf32>
    %cst_44 = arith.constant -1.000000e+30 : f32
    %124 = vector.shape_cast %13 : vector<1x384xi1> to vector<1x384xi1>
    %125 = vector.broadcast %124 : vector<1x384xi1> to vector<16x384xi1>
    %126 = vector.broadcast %cst_44 : f32 to vector<16x384xf32>
    %127 = arith.select %125, %107, %126 : vector<16x384xi1>, vector<16x384xf32>
    %128 = vector.shape_cast %127 : vector<16x384xf32> to vector<1x16x384xf32>
    %cst_45 = arith.constant dense<0xFF800000> : vector<1xf32>
    %129 = vector.multi_reduction <maximumf>, %128, %cst_45 [1, 2] : vector<1x16x384xf32> to vector<1xf32>
    %130 = vector.shape_cast %129 : vector<1xf32> to vector<1x1x1xf32>
    %131 = vector.extract %130[0, 0, 0] : f32 from vector<1x1x1xf32>
    %132 = vector.broadcast %131 : f32 to vector<1x1xf32>
    %133 = vector.broadcast %112 : vector<8x1xf32> to vector<8x384xf32>
    %134 = arith.subf %103, %133 : vector<8x384xf32>
    %135 = vector.broadcast %123 : vector<8x1xf32> to vector<8x384xf32>
    %136 = arith.subf %134, %135 : vector<8x384xf32>
    %cst_46 = arith.constant 0.000000e+00 : f32
    %137 = vector.shape_cast %13 : vector<1x384xi1> to vector<1x384xi1>
    %138 = vector.broadcast %137 : vector<1x384xi1> to vector<8x384xi1>
    %139 = vector.broadcast %cst_46 : f32 to vector<8x384xf32>
    %140 = arith.select %138, %136, %139 : vector<8x384xi1>, vector<8x384xf32>
    %141 = math.exp %140 : vector<8x384xf32>
    %cst_47 = arith.constant 9.99999974E-5 : f32
    %142 = vector.broadcast %cst_47 : f32 to vector<8x384xf32>
    %143 = arith.addf %141, %142 : vector<8x384xf32>
    %cst_48 = arith.constant 0.0613139346 : f32
    %144 = vector.broadcast %cst_48 : f32 to vector<8x384xf32>
    %145 = arith.mulf %144, %143 : vector<8x384xf32>
    %146 = vector.broadcast %15 : vector<1x384xf32> to vector<8x384xf32>
    %147 = arith.mulf %146, %145 : vector<8x384xf32>
    %148 = vector.broadcast %117 : vector<16x1xf32> to vector<16x384xf32>
    %149 = arith.subf %107, %148 : vector<16x384xf32>
    %150 = vector.broadcast %132 : vector<1x1xf32> to vector<16x384xf32>
    %151 = arith.subf %149, %150 : vector<16x384xf32>
    %cst_49 = arith.constant 0.000000e+00 : f32
    %152 = vector.shape_cast %13 : vector<1x384xi1> to vector<1x384xi1>
    %153 = vector.broadcast %152 : vector<1x384xi1> to vector<16x384xi1>
    %154 = vector.broadcast %cst_49 : f32 to vector<16x384xf32>
    %155 = arith.select %153, %151, %154 : vector<16x384xi1>, vector<16x384xf32>
    %156 = math.exp %155 : vector<16x384xf32>
    %cst_50 = arith.constant 9.99999974E-5 : f32
    %157 = vector.broadcast %cst_50 : f32 to vector<16x384xf32>
    %158 = arith.addf %156, %157 : vector<16x384xf32>
    %cst_51 = arith.constant 0.0613139346 : f32
    %159 = vector.broadcast %cst_51 : f32 to vector<16x384xf32>
    %160 = arith.mulf %159, %158 : vector<16x384xf32>
    %161 = vector.broadcast %15 : vector<1x384xf32> to vector<16x384xf32>
    %162 = arith.mulf %161, %160 : vector<16x384xf32>
    %cst_52 = arith.constant dense<0.000000e+00> : vector<384xf32>
    %163 = vector.multi_reduction <add>, %162, %cst_52 [0] : vector<16x384xf32> to vector<384xf32>
    %164 = vector.shape_cast %163 : vector<384xf32> to vector<1x384xf32>
    %165 = vector.broadcast %164 : vector<1x384xf32> to vector<8x384xf32>
    %166 = arith.mulf %147, %165 : vector<8x384xf32>
    %cst_53 = arith.constant dense<0.000000e+00> : vector<8xf32>
    %167 = vector.multi_reduction <add>, %166, %cst_53 [1] : vector<8x384xf32> to vector<8xf32>
    %168 = vector.shape_cast %167 : vector<8xf32> to vector<8x1xf32>
    %169 = tpu.reciprocal %168 {approx = true} : vector<8x1xf32> -> vector<8x1xf32>
    %170 = arith.truncf %162 : vector<16x384xf32> to vector<16x384xbf16>
    %171 = arith.truncf %99 : vector<16x64xf32> to vector<16x64xbf16>
    %cst_54 = arith.constant dense<0.000000e+00> : vector<384x64xf32>
    %172 = tpu.matmul %170, %171, %cst_54 {dimension_numbers = #tpu.dot_dimension_numbers<[0], [0], [1], [1], [0, 1, 1, 1], [], []>} : vector<16x384xbf16>, vector<16x64xbf16>, vector<384x64xf32> -> vector<384x64xf32>
    %173 = arith.truncf %147 : vector<8x384xf32> to vector<8x384xbf16>
    %174 = arith.truncf %172 : vector<384x64xf32> to vector<384x64xbf16>
    %cst_55 = arith.constant dense<0.000000e+00> : vector<8x64xf32>
    %175 = tpu.matmul %173, %174, %cst_55 {dimension_numbers = #tpu.dot_dimension_numbers<[1], [0], [0], [1], [0, 0, 1, 1], [], []>} : vector<8x384xbf16>, vector<384x64xbf16>, vector<8x64xf32> -> vector<8x64xf32>
    %176 = vector.broadcast %169 : vector<8x1xf32> to vector<8x64xf32>
    %177 = arith.mulf %175, %176 : vector<8x64xf32>
    %178 = tpu.concatenate %96, %177 in 1 : vector<8x64xf32>, vector<8x64xf32> -> vector<8x128xf32>
    %179 = arith.truncf %178 : vector<8x128xf32> to vector<8x128xbf16>
    %c0_56 = arith.constant 0 : index
    %c0_57 = arith.constant 0 : index
    %180 = vector.load %arg6[%c0_56, %c0_57] : memref<128x32xbf16, #tpu.memory_space<vmem>>, vector<128x32xbf16>
    %cst_58 = arith.constant dense<0.000000e+00> : vector<8x32xf32>
    %181 = tpu.matmul %179, %180, %cst_58 {dimension_numbers = #tpu.dot_dimension_numbers<[1], [0], [0], [1], [0, 0, 1, 1], [], []>} : vector<8x128xbf16>, vector<128x32xbf16>, vector<8x32xf32> -> vector<8x32xf32>
    %c0_59 = arith.constant 0 : index
    %c0_60 = arith.constant 0 : index
    %182 = vector.load %arg7[%c0_59, %c0_60] : memref<1x32xf32, #tpu.memory_space<vmem>>, vector<1x32xf32>
    %183 = vector.broadcast %182 : vector<1x32xf32> to vector<8x32xf32>
    %184 = arith.addf %181, %183 : vector<8x32xf32>
    %185 = arith.addf %1, %184 : vector<8x32xf32>
    %c0_61 = arith.constant 0 : index
    %c0_62 = arith.constant 0 : index
    %186 = vector.load %arg8[%c0_61, %c0_62] : memref<1x32xf32, #tpu.memory_space<vmem>>, vector<1x32xf32>
    %c0_63 = arith.constant 0 : index
    %c0_64 = arith.constant 0 : index
    %187 = vector.load %arg9[%c0_63, %c0_64] : memref<1x32xf32, #tpu.memory_space<vmem>>, vector<1x32xf32>
    %cst_65 = arith.constant dense<0.000000e+00> : vector<8xf32>
    %188 = vector.multi_reduction <add>, %185, %cst_65 [1] : vector<8x32xf32> to vector<8xf32>
    %189 = vector.shape_cast %188 : vector<8xf32> to vector<8x1xf32>
    %cst_66 = arith.constant 3.200000e+01 : f32
    %190 = vector.broadcast %cst_66 : f32 to vector<8x1xf32>
    %191 = arith.divf %189, %190 : vector<8x1xf32>
    %192 = vector.broadcast %191 : vector<8x1xf32> to vector<8x32xf32>
    %193 = arith.subf %185, %192 : vector<8x32xf32>
    %194 = arith.mulf %193, %193 : vector<8x32xf32>
    %cst_67 = arith.constant dense<0.000000e+00> : vector<8xf32>
    %195 = vector.multi_reduction <add>, %194, %cst_67 [1] : vector<8x32xf32> to vector<8xf32>
    %196 = vector.shape_cast %195 : vector<8xf32> to vector<8x1xf32>
    %cst_68 = arith.constant 3.200000e+01 : f32
    %197 = vector.broadcast %cst_68 : f32 to vector<8x1xf32>
    %198 = arith.divf %196, %197 : vector<8x1xf32>
    %199 = vector.broadcast %191 : vector<8x1xf32> to vector<8x32xf32>
    %200 = arith.subf %185, %199 : vector<8x32xf32>
    %cst_69 = arith.constant 9.99999974E-6 : f32
    %201 = vector.broadcast %cst_69 : f32 to vector<8x1xf32>
    %202 = arith.addf %198, %201 : vector<8x1xf32>
    %203 = math.rsqrt %202 : vector<8x1xf32>
    %204 = vector.broadcast %203 : vector<8x1xf32> to vector<8x32xf32>
    %205 = arith.mulf %200, %204 : vector<8x32xf32>
    %206 = vector.broadcast %186 : vector<1x32xf32> to vector<8x32xf32>
    %207 = arith.mulf %205, %206 : vector<8x32xf32>
    %208 = vector.broadcast %187 : vector<1x32xf32> to vector<8x32xf32>
    %209 = arith.addf %207, %208 : vector<8x32xf32>
    %c0_70 = arith.constant 0 : index
    %c0_71 = arith.constant 0 : index
    %c0_72 = arith.constant 0 : index
    %210 = vector.load %arg10[%c0_70, %c0_71, %c0_72] : memref<1x8x32xf32, #tpu.memory_space<vmem>>, vector<1x8x32xf32>
    %211 = vector.shape_cast %210 : vector<1x8x32xf32> to vector<8x32xf32>
    %212 = vector.shape_cast %209 : vector<8x32xf32> to vector<1x8x32xf32>
    tpu.vector_store %arg10[%c0_70, %c0_71, %c0_72], %212 {strides = array<i32>} : memref<1x8x32xf32, #tpu.memory_space<vmem>>, vector<1x8x32xf32>,
    return
  }
  func.func @transform_0(%arg0: i32) -> (i32, i32, i32) {
    %c0_i32 = arith.constant 0 : i32
    %c0_i32_0 = arith.constant 0 : i32
    %c0_i32_1 = arith.constant 0 : i32
    return %arg0, %c0_i32, %c0_i32_0 : i32, i32, i32
  }
  func.func @transform_1(%arg0: i32) -> (i32, i32, i32) {
    %c0_i32 = arith.constant 0 : i32
    %c0_i32_0 = arith.constant 0 : i32
    %c0_i32_1 = arith.constant 0 : i32
    return %arg0, %c0_i32, %c0_i32_0 : i32, i32, i32
  }
  func.func @transform_2(%arg0: i32) -> (i32, i32) {
    %c0_i32 = arith.constant 0 : i32
    %c0_i32_0 = arith.constant 0 : i32
    %c0_i32_1 = arith.constant 0 : i32
    return %c0_i32, %c0_i32_0 : i32, i32
  }
  func.func @transform_3(%arg0: i32) -> (i32, i32) {
    %c0_i32 = arith.constant 0 : i32
    %c0_i32_0 = arith.constant 0 : i32
    %c0_i32_1 = arith.constant 0 : i32
    return %c0_i32, %c0_i32_0 : i32, i32
  }
  func.func @transform_4(%arg0: i32) -> (i32, i32) {
    %c0_i32 = arith.constant 0 : i32
    %c0_i32_0 = arith.constant 0 : i32
    %c0_i32_1 = arith.constant 0 : i32
    return %c0_i32, %c0_i32_0 : i32, i32
  }
  func.func @transform_5(%arg0: i32) -> (i32, i32) {
    %c0_i32 = arith.constant 0 : i32
    %c0_i32_0 = arith.constant 0 : i32
    %c0_i32_1 = arith.constant 0 : i32
    return %c0_i32, %c0_i32_0 : i32, i32
  }
  func.func @transform_6(%arg0: i32) -> (i32, i32) {
    %c0_i32 = arith.constant 0 : i32
    %c0_i32_0 = arith.constant 0 : i32
    %c0_i32_1 = arith.constant 0 : i32
    return %c0_i32, %c0_i32_0 : i32, i32
  }
  func.func @transform_7(%arg0: i32) -> (i32, i32) {
    %c0_i32 = arith.constant 0 : i32
    %c0_i32_0 = arith.constant 0 : i32
    %c0_i32_1 = arith.constant 0 : i32
    return %c0_i32, %c0_i32_0 : i32, i32
  }
  func.func @transform_8(%arg0: i32) -> (i32, i32) {
    %c0_i32 = arith.constant 0 : i32
    %c0_i32_0 = arith.constant 0 : i32
    %c0_i32_1 = arith.constant 0 : i32
    return %c0_i32, %c0_i32_0 : i32, i32
  }
  func.func @transform_9(%arg0: i32) -> (i32, i32, i32) {
    %c0_i32 = arith.constant 0 : i32
    %c0_i32_0 = arith.constant 0 : i32
    %c0_i32_1 = arith.constant 0 : i32
    return %arg0, %c0_i32, %c0_i32_0 : i32, i32, i32
  }
}

</mosaic_0001>

<llo_original>
// kernel: tpu_custom_call.1
$region0: #{tpu_custom_call.1}
  #allocation0 [shape = 'u32[]', space=smem, size = 0x4, offset = 0x4, fixed_abs, tag = 'smem constant byte address 0x4 - core index']
  #allocation1 [shape = 'u32[72,128]{1,0:T(1,128)}', space=vmem, size = 0x9000, scoped, tag = 'internal scratch']
  %s0 = inlined_call_operand.vmem [shape: f32[2,8,32], index: 0, kind: input, shape index: {}]
  %s1 = inlined_call_operand.vmem [shape: f32[2,16,32], index: 1, kind: input, shape index: {}]
  %s2 = inlined_call_operand.vmem [shape: bf16[32,128], index: 2, kind: input, shape index: {}]
  %s3 = inlined_call_operand.vmem [shape: bf16[32,256], index: 3, kind: input, shape index: {}]
  %s4 = inlined_call_operand.vmem [shape: bf16[384,64], index: 4, kind: input, shape index: {}]
  %s5 = inlined_call_operand.vmem [shape: bf16[128,32], index: 5, kind: input, shape index: {}]
  %s6 = inlined_call_operand.vmem [shape: f32[1,32], index: 6, kind: input, shape index: {}]
  %s7 = inlined_call_operand.vmem [shape: f32[1,32], index: 7, kind: input, shape index: {}]
  %s8 = inlined_call_operand.vmem [shape: f32[1,32], index: 8, kind: input, shape index: {}]
  %s9 = inlined_call_operand.hbm [shape: f32[2,8,32], index: 9, kind: output, shape index: {}]
  %s10 = sld [smem:[#allocation0]]
  $region69: #{tpu_custom_call.1} parent=0
    _
  %s12 = ssub.s32 1, %s10
  %s13 = scalar_select 0, %s12, %s10
  $region1: #{tpu_custom_call.1} parent=0
    #allocation2 [shape = 'u8[8192]{0}', space=vmem, size = 0x2000, scoped, tag = 'output window, operand 0']
    #allocation3 [shape = 's32[2]{0}', space=sflag, size = 0x8, scoped, tag = 'scoped memory for tpu_custom_call.1']
    %14 = vsyncpa [#allocation3], 0
    %s15 = scalar_lea.sflag [#allocation3], 1
    %16 = vsyncpa %s15, 0
    loop: start=0, step=1, limit=4
    $region2: #{tpu_custom_call.1} parent=1 // loop_pre_header
      _
    $region3: #{tpu_custom_call.1} parent=1 // loop_header
      %s18 = sphi 0, %s22
      %p19 = scmp.ge.s32.totalorder %s18, 4
      %s28 = sphi 0, %s30
      %s31 = sphi 0, %s28
      %s32 = sphi 0, %s31
      %s48 = sphi 0, %s32
      %s54 = sphi 0, %s56
      %s57 = sphi 0, %s54
      %s58 = sphi 0, %s57
      %s74 = sphi 0, %s58
      %s78 = sphi 0, %s78
      %s80 = sphi 0, %s78
      %s81 = sphi 0, %s80
      %s95 = sphi 0, %s81
      %s99 = sphi 0, %s99
      %s101 = sphi 0, %s99
      %s102 = sphi 0, %s101
      %s116 = sphi 0, %s102
      %s120 = sphi 0, %s120
      %s122 = sphi 0, %s120
      %s123 = sphi 0, %s122
      %s137 = sphi 0, %s123
      %s141 = sphi 0, %s141
      %s143 = sphi 0, %s141
      %s144 = sphi 0, %s143
      %s158 = sphi 0, %s144
      %s162 = sphi 0, %s162
      %s164 = sphi 0, %s162
      %s165 = sphi 0, %s164
      %s179 = sphi 0, %s165
      %s183 = sphi 0, %s183
      %s185 = sphi 0, %s183
      %s186 = sphi 0, %s185
      %s200 = sphi 0, %s186
      %s204 = sphi 0, %s204
      %s206 = sphi 0, %s204
      %s207 = sphi 0, %s206
      %s221 = sphi 0, %s207
      %s227 = sphi 0, %s229
      %s230 = sphi 0, %s227
      %s231 = sphi 0, %s230
      %s247 = sphi 0, %s231
    $region4: #{tpu_custom_call.1} parent=1 // loop_header_branch
      %21 = sbr.rel (%p19) target = $region8
    $region5: #{tpu_custom_call.1} parent=1 // loop_body
      %s23 = ssub.s32 %s18, 1
      %s24 = ssub.s32 %s18, 2
      %s25 = sadd.s32 %s18, 1
      %s26 = ssub.s32 %s18, %s25
      %p27 = scmp.eq.s32.totalorder %s26, 0
      %s29 = sadd.s32 %s28, 1
      %s30 = scalar_select %p27, %s28, %s29
      %p33 = pneg %p27
      %p34 = scmp.eq.s32.totalorder %s18, 1
      %p35 = por %p33, %p34
      %p36 = scmp.ne.s32.totalorder %s28, %s31
      %p37 = scmp.eq.s32.totalorder %s18, 0
      %p38 = por %p36, %p37
      %p39 = scmp.ne.s32.totalorder %s28, %s31
      %p40 = scmp.eq.s32.totalorder %s23, 1
      %p41 = por %p39, %p40
      %p42 = scmp.ne.s32.totalorder %s31, %s32
      %p43 = scmp.eq.s32.totalorder %s23, 0
      %p44 = por %p42, %p43
      %p45 = scmp.ne.s32.totalorder %s31, %s32
      %p46 = scmp.eq.s32.totalorder %s24, 1
      %p47 = por %p45, %p46
      %p49 = scmp.ne.s32.totalorder %s32, %s48
      %p50 = scmp.eq.s32.totalorder %s24, 0
      %p51 = por %p49, %p50
      %s52 = ssub.s32 %s18, %s25
      %p53 = scmp.eq.s32.totalorder %s52, 0
      %s55 = sadd.s32 %s54, 1
      %s56 = scalar_select %p53, %s54, %s55
      %p59 = pneg %p53
      %p60 = scmp.eq.s32.totalorder %s18, 1
      %p61 = por %p59, %p60
      %p62 = scmp.ne.s32.totalorder %s54, %s57
      %p63 = scmp.eq.s32.totalorder %s18, 0
      %p64 = por %p62, %p63
      %p65 = scmp.ne.s32.totalorder %s54, %s57
      %p66 = scmp.eq.s32.totalorder %s23, 1
      %p67 = por %p65, %p66
      %p68 = scmp.ne.s32.totalorder %s57, %s58
      %p69 = scmp.eq.s32.totalorder %s23, 0
      %p70 = por %p68, %p69
      %p71 = scmp.ne.s32.totalorder %s57, %s58
      %p72 = scmp.eq.s32.totalorder %s24, 1
      %p73 = por %p71, %p72
      %p75 = scmp.ne.s32.totalorder %s58, %s74
      %p76 = scmp.eq.s32.totalorder %s24, 0
      %p77 = por %p75, %p76
      %s79 = sadd.s32 %s78, 1
      %p82 = scmp.eq.s32.totalorder %s18, 1
      %p83 = scmp.ne.s32.totalorder %s78, %s80
      %p84 = scmp.eq.s32.totalorder %s18, 0
      %p85 = por %p83, %p84
      %p86 = scmp.ne.s32.totalorder %s78, %s80
      %p87 = scmp.eq.s32.totalorder %s23, 1
      %p88 = por %p86, %p87
      %p89 = scmp.ne.s32.totalorder %s80, %s81
      %p90 = scmp.eq.s32.totalorder %s23, 0
      %p91 = por %p89, %p90
      %p92 = scmp.ne.s32.totalorder %s80, %s81
      %p93 = scmp.eq.s32.totalorder %s24, 1
      %p94 = por %p92, %p93
      %p96 = scmp.ne.s32.totalorder %s81, %s95
      %p97 = scmp.eq.s32.totalorder %s24, 0
      %p98 = por %p96, %p97
      %s100 = sadd.s32 %s99, 1
      %p103 = scmp.eq.s32.totalorder %s18, 1
      %p104 = scmp.ne.s32.totalorder %s99, %s101
      %p105 = scmp.eq.s32.totalorder %s18, 0
      %p106 = por %p104, %p105
      %p107 = scmp.ne.s32.totalorder %s99, %s101
      %p108 = scmp.eq.s32.totalorder %s23, 1
      %p109 = por %p107, %p108
      %p110 = scmp.ne.s32.totalorder %s101, %s102
      %p111 = scmp.eq.s32.totalorder %s23, 0
      %p112 = por %p110, %p111
      %p113 = scmp.ne.s32.totalorder %s101, %s102
      %p114 = scmp.eq.s32.totalorder %s24, 1
      %p115 = por %p113, %p114
      %p117 = scmp.ne.s32.totalorder %s102, %s116
      %p118 = scmp.eq.s32.totalorder %s24, 0
      %p119 = por %p117, %p118
      %s121 = sadd.s32 %s120, 1
      %p124 = scmp.eq.s32.totalorder %s18, 1
      %p125 = scmp.ne.s32.totalorder %s120, %s122
      %p126 = scmp.eq.s32.totalorder %s18, 0
      %p127 = por %p125, %p126
      %p128 = scmp.ne.s32.totalorder %s120, %s122
      %p129 = scmp.eq.s32.totalorder %s23, 1
      %p130 = por %p128, %p129
      %p131 = scmp.ne.s32.totalorder %s122, %s123
      %p132 = scmp.eq.s32.totalorder %s23, 0
      %p133 = por %p131, %p132
      %p134 = scmp.ne.s32.totalorder %s122, %s123
      %p135 = scmp.eq.s32.totalorder %s24, 1
      %p136 = por %p134, %p135
      %p138 = scmp.ne.s32.totalorder %s123, %s137
      %p139 = scmp.eq.s32.totalorder %s24, 0
      %p140 = por %p138, %p139
      %s142 = sadd.s32 %s141, 1
      %p145 = scmp.eq.s32.totalorder %s18, 1
      %p146 = scmp.ne.s32.totalorder %s141, %s143
      %p147 = scmp.eq.s32.totalorder %s18, 0
      %p148 = por %p146, %p147
      %p149 = scmp.ne.s32.totalorder %s141, %s143
      %p150 = scmp.eq.s32.totalorder %s23, 1
      %p151 = por %p149, %p150
      %p152 = scmp.ne.s32.totalorder %s143, %s144
      %p153 = scmp.eq.s32.totalorder %s23, 0
      %p154 = por %p152, %p153
      %p155 = scmp.ne.s32.totalorder %s143, %s144
      %p156 = scmp.eq.s32.totalorder %s24, 1
      %p157 = por %p155, %p156
      %p159 = scmp.ne.s32.totalorder %s144, %s158
      %p160 = scmp.eq.s32.totalorder %s24, 0
      %p161 = por %p159, %p160
      %s163 = sadd.s32 %s162, 1
      %p166 = scmp.eq.s32.totalorder %s18, 1
      %p167 = scmp.ne.s32.totalorder %s162, %s164
      %p168 = scmp.eq.s32.totalorder %s18, 0
      %p169 = por %p167, %p168
      %p170 = scmp.ne.s32.totalorder %s162, %s164
      %p171 = scmp.eq.s32.totalorder %s23, 1
      %p172 = por %p170, %p171
      %p173 = scmp.ne.s32.totalorder %s164, %s165
      %p174 = scmp.eq.s32.totalorder %s23, 0
      %p175 = por %p173, %p174
      %p176 = scmp.ne.s32.totalorder %s164, %s165
      %p177 = scmp.eq.s32.totalorder %s24, 1
      %p178 = por %p176, %p177
      %p180 = scmp.ne.s32.totalorder %s165, %s179
      %p181 = scmp.eq.s32.totalorder %s24, 0
      %p182 = por %p180, %p181
      %s184 = sadd.s32 %s183, 1
      %p187 = scmp.eq.s32.totalorder %s18, 1
      %p188 = scmp.ne.s32.totalorder %s183, %s185
      %p189 = scmp.eq.s32.totalorder %s18, 0
      %p190 = por %p188, %p189
      %p191 = scmp.ne.s32.totalorder %s183, %s185
      %p192 = scmp.eq.s32.totalorder %s23, 1
      %p193 = por %p191, %p192
      %p194 = scmp.ne.s32.totalorder %s185, %s186
      %p195 = scmp.eq.s32.totalorder %s23, 0
      %p196 = por %p194, %p195
      %p197 = scmp.ne.s32.totalorder %s185, %s186
      %p198 = scmp.eq.s32.totalorder %s24, 1
      %p199 = por %p197, %p198
      %p201 = scmp.ne.s32.totalorder %s186, %s200
      %p202 = scmp.eq.s32.totalorder %s24, 0
      %p203 = por %p201, %p202
      %s205 = sadd.s32 %s204, 1
      %p208 = scmp.eq.s32.totalorder %s18, 1
      %p209 = scmp.ne.s32.totalorder %s204, %s206
      %p210 = scmp.eq.s32.totalorder %s18, 0
      %p211 = por %p209, %p210
      %p212 = scmp.ne.s32.totalorder %s204, %s206
      %p213 = scmp.eq.s32.totalorder %s23, 1
      %p214 = por %p212, %p213
      %p215 = scmp.ne.s32.totalorder %s206, %s207
      %p216 = scmp.eq.s32.totalorder %s23, 0
      %p217 = por %p215, %p216
      %p218 = scmp.ne.s32.totalorder %s206, %s207
      %p219 = scmp.eq.s32.totalorder %s24, 1
      %p220 = por %p218, %p219
      %p222 = scmp.ne.s32.totalorder %s207, %s221
      %p223 = scmp.eq.s32.totalorder %s24, 0
      %p224 = por %p222, %p223
      %s225 = ssub.s32 %s18, %s25
      %p226 = scmp.eq.s32.totalorder %s225, 0
      %s228 = sadd.s32 %s227, 1
      %s229 = scalar_select %p226, %s227, %s228
      %p232 = pneg %p226
      %p233 = scmp.eq.s32.totalorder %s18, 1
      %p234 = por %p232, %p233
      %p235 = scmp.ne.s32.totalorder %s227, %s230
      %p236 = scmp.eq.s32.totalorder %s18, 0
      %p237 = por %p235, %p236
      %p238 = scmp.ne.s32.totalorder %s227, %s230
      %p239 = scmp.eq.s32.totalorder %s23, 1
      %p240 = por %p238, %p239
      %p241 = scmp.ne.s32.totalorder %s230, %s231
      %p242 = scmp.eq.s32.totalorder %s23, 0
      %p243 = por %p241, %p242
      %p244 = scmp.ne.s32.totalorder %s230, %s231
      %p245 = scmp.eq.s32.totalorder %s24, 1
      %p246 = por %p244, %p245
      %p248 = scmp.ne.s32.totalorder %s231, %s247
      %p249 = scmp.eq.s32.totalorder %s24, 0
      %p250 = por %p248, %p249
      %p251 = scmp.le.s32.totalorder 1, %s18
      %p252 = scmp.lt.s32.totalorder %s18, 3
      %p253 = pnand %p251, %p252
      %p254 = pneg %p253
      // Predicated region
      $region9: #{tpu_custom_call.1} parent=5 // pred_check
        _
      $region10: #{tpu_custom_call.1} parent=5 // pred_check_branch
        %256 = sbr.rel (%p253) target = $region12
      $region11: #{tpu_custom_call.1} parent=5 // pred_region
        %s257 = ssub.s32 %s18, 1
        // Predicated region
        $region13: #{tpu_custom_call.1} parent=11 // pred_check
          %p258 = pneg %p91
        $region14: #{tpu_custom_call.1} parent=11 // pred_check_branch
          %260 = sbr.rel (%p258) target = $region16
        $region15: #{tpu_custom_call.1} parent=11 // pred_region
          _
        $region16: #{tpu_custom_call.1} parent=11 // pred_fallthru
          _
        // Predicated region
        $region17: #{tpu_custom_call.1} parent=11 // pred_check
          %p261 = pneg %p112
        $region18: #{tpu_custom_call.1} parent=11 // pred_check_branch
          %263 = sbr.rel (%p261) target = $region20
        $region19: #{tpu_custom_call.1} parent=11 // pred_region
          _
        $region20: #{tpu_custom_call.1} parent=11 // pred_fallthru
          _
        // Predicated region
        $region21: #{tpu_custom_call.1} parent=11 // pred_check
          %p264 = pneg %p133
        $region22: #{tpu_custom_call.1} parent=11 // pred_check_branch
          %266 = sbr.rel (%p264) target = $region24
        $region23: #{tpu_custom_call.1} parent=11 // pred_region
          _
        $region24: #{tpu_custom_call.1} parent=11 // pred_fallthru
          _
        // Predicated region
        $region25: #{tpu_custom_call.1} parent=11 // pred_check
          %p267 = pneg %p154
        $region26: #{tpu_custom_call.1} parent=11 // pred_check_branch
          %269 = sbr.rel (%p267) target = $region28
        $region27: #{tpu_custom_call.1} parent=11 // pred_region
          _
        $region28: #{tpu_custom_call.1} parent=11 // pred_fallthru
          _
        // Predicated region
        $region29: #{tpu_custom_call.1} parent=11 // pred_check
          %p270 = pneg %p175
        $region30: #{tpu_custom_call.1} parent=11 // pred_check_branch
          %272 = sbr.rel (%p270) target = $region32
        $region31: #{tpu_custom_call.1} parent=11 // pred_region
          _
        $region32: #{tpu_custom_call.1} parent=11 // pred_fallthru
          _
        // Predicated region
        $region33: #{tpu_custom_call.1} parent=11 // pred_check
          %p273 = pneg %p196
        $region34: #{tpu_custom_call.1} parent=11 // pred_check_branch
          %275 = sbr.rel (%p273) target = $region36
        $region35: #{tpu_custom_call.1} parent=11 // pred_region
          _
        $region36: #{tpu_custom_call.1} parent=11 // pred_fallthru
          _
        // Predicated region
        $region37: #{tpu_custom_call.1} parent=11 // pred_check
          %p276 = pneg %p217
        $region38: #{tpu_custom_call.1} parent=11 // pred_check_branch
          %278 = sbr.rel (%p276) target = $region40
        $region39: #{tpu_custom_call.1} parent=11 // pred_region
          _
        $region40: #{tpu_custom_call.1} parent=11 // pred_fallthru
          _
      $region12: #{tpu_custom_call.1} parent=5 // pred_fallthru
        _
      %p279 = scmp.lt.s32.totalorder %s18, 2
      // Predicated region
      $region41: #{tpu_custom_call.1} parent=5 // pred_check
        %p280 = pneg %p279
      $region42: #{tpu_custom_call.1} parent=5 // pred_check_branch
        %282 = sbr.rel (%p280) target = $region44
      $region43: #{tpu_custom_call.1} parent=5 // pred_region
        // Predicated region
        $region45: #{tpu_custom_call.1} parent=43 // pred_check
          %p283 = pneg %p38
        $region46: #{tpu_custom_call.1} parent=43 // pred_check_branch
          %285 = sbr.rel (%p283) target = $region48
        $region47: #{tpu_custom_call.1} parent=43 // pred_region
          %p286 = scmp.lt.s32.totalorder %s18, 1
          %s287 = scalar_select %p286, %s18, 1
          %s288 = smul.addr %s287, 8
          %s289 = scalar_lea.vmem %s0, %s288
        $region48: #{tpu_custom_call.1} parent=43 // pred_fallthru
          _
        // Predicated region
        $region49: #{tpu_custom_call.1} parent=43 // pred_check
          %p290 = pneg %p64
        $region50: #{tpu_custom_call.1} parent=43 // pred_check_branch
          %292 = sbr.rel (%p290) target = $region52
        $region51: #{tpu_custom_call.1} parent=43 // pred_region
          %p293 = scmp.lt.s32.totalorder %s18, 1
          %s294 = scalar_select %p293, %s18, 1
          %s295 = smul.addr %s294, 2
          %s296 = smul.addr %s295, 8
          %s297 = scalar_lea.vmem %s1, %s296
        $region52: #{tpu_custom_call.1} parent=43 // pred_fallthru
          _
      $region44: #{tpu_custom_call.1} parent=5 // pred_fallthru
        _
      %p298 = scmp.le.s32.totalorder 1, %s18
      %p299 = scmp.lt.s32.totalorder %s18, 3
      %p300 = pnand %p298, %p299
      %p301 = pneg %p300
      // Predicated region
      $region53: #{tpu_custom_call.1} parent=5 // pred_check
        _
      $region54: #{tpu_custom_call.1} parent=5 // pred_check_branch
        %303 = sbr.rel (%p300) target = $region56
      $region55: #{tpu_custom_call.1} parent=5 // pred_region
        %s304 = ssub.s32 %s18, 1
        %p305 = scmp.lt.s32.totalorder %s23, 1
        %s306 = scalar_select %p305, %s23, 1
        %s307 = smul.addr %s306, 8
        %s308 = scalar_lea.vmem %s0, %s307
        %p309 = pneg %p44
        %p310 = pneg %p41
        %p311 = scmp.lt.s32.totalorder %s23, 1
        %s312 = scalar_select %p311, %s23, 1
        %s313 = smul.addr %s312, 2
        %s314 = smul.addr %s313, 8
        %s315 = scalar_lea.vmem %s1, %s314
        %p316 = pneg %p70
        %p317 = pneg %p67
        %p318 = pneg %p91
        %p319 = pneg %p88
        %p320 = pneg %p112
        %p321 = pneg %p109
        %p322 = pneg %p133
        %p323 = pneg %p130
        %p324 = pneg %p154
        %p325 = pneg %p151
        %p326 = pneg %p175
        %p327 = pneg %p172
        %p328 = pneg %p196
        %p329 = pneg %p193
        %p330 = pneg %p217
        %p331 = pneg %p214
        %p332 = pneg %p243
        %p333 = pneg %p240
        %s334 = sand.u32 %s230, 1
        %s335 = scalar_lea.sflag [#allocation3], %s334
        %s336 = sand.u32 %s230, 1
        %s337 = smul.addr %s336, 8
        %s338 = scalar_lea.vmem [#allocation2], %s337
        %p339 = scmp.lt.s32.totalorder %s23, 1
        %s340 = scalar_select %p339, %s23, 1
        %s341 = smul.addr %s340, 8
        %s342 = scalar_lea.vmem %s0, %s341
        %p343 = scmp.lt.s32.totalorder %s23, 1
        %s344 = scalar_select %p343, %s23, 1
        %s345 = smul.addr %s344, 2
        %s346 = smul.addr %s345, 8
        %s347 = scalar_lea.vmem %s1, %s346
        %v349 = vld [vmem:[%s342] sm:$0xff]
        %v350 = vld [vmem:[%s347] sm:$0xff]
        %v351 = vld [vmem:[%s347 + $0x8] sm:$0xff]
        %v352 = vld [vmem:[%s2] sm:$0xf]
        %v353 = vld [vmem:[%s2 + $0x4] sm:$0xf]
        %v354 = vld [vmem:[%s2 + $0x8] sm:$0xf]
        %v355 = vld [vmem:[%s2 + $0xc] sm:$0xf]
        %v356 = vld [vmem:[%s3] sm:$0xff]
        %v357 = vld [vmem:[%s3 + $0x8] sm:$0xff]
        %v358 = vld [vmem:[%s3 + $0x10] sm:$0xff]
        %v359 = vld [vmem:[%s3 + $0x18] sm:$0xff]
        %v360 = vld [vmem:[%s4] sm:$0xf]
        %v361 = vld [vmem:[%s4 + $0x4] sm:$0xf]
        %v362 = vld [vmem:[%s4 + $0x8] sm:$0xf]
        %v363 = vld [vmem:[%s4 + $0xc] sm:$0xf]
        %v364 = vld [vmem:[%s4 + $0x10] sm:$0xf]
        %v365 = vld [vmem:[%s4 + $0x14] sm:$0xf]
        %v366 = vld [vmem:[%s4 + $0x18] sm:$0xf]
        %v367 = vld [vmem:[%s4 + $0x1c] sm:$0xf]
        %v368 = vld [vmem:[%s4 + $0x20] sm:$0xf]
        %v369 = vld [vmem:[%s4 + $0x24] sm:$0xf]
        %v370 = vld [vmem:[%s4 + $0x28] sm:$0xf]
        %v371 = vld [vmem:[%s4 + $0x2c] sm:$0xf]
        %v372 = vld [vmem:[%s4 + $0x30] sm:$0xf]
        %v373 = vld [vmem:[%s4 + $0x34] sm:$0xf]
        %v374 = vld [vmem:[%s4 + $0x38] sm:$0xf]
        %v375 = vld [vmem:[%s4 + $0x3c] sm:$0xf]
        %v376 = vld [vmem:[%s4 + $0x40] sm:$0xf]
        %v377 = vld [vmem:[%s4 + $0x44] sm:$0xf]
        %v378 = vld [vmem:[%s4 + $0x48] sm:$0xf]
        %v379 = vld [vmem:[%s4 + $0x4c] sm:$0xf]
        %v380 = vld [vmem:[%s4 + $0x50] sm:$0xf]
        %v381 = vld [vmem:[%s4 + $0x54] sm:$0xf]
        %v382 = vld [vmem:[%s4 + $0x58] sm:$0xf]
        %v383 = vld [vmem:[%s4 + $0x5c] sm:$0xf]
        %v384 = vld [vmem:[%s4 + $0x60] sm:$0xf]
        %v385 = vld [vmem:[%s4 + $0x64] sm:$0xf]
        %v386 = vld [vmem:[%s4 + $0x68] sm:$0xf]
        %v387 = vld [vmem:[%s4 + $0x6c] sm:$0xf]
        %v388 = vld [vmem:[%s4 + $0x70] sm:$0xf]
        %v389 = vld [vmem:[%s4 + $0x74] sm:$0xf]
        %v390 = vld [vmem:[%s4 + $0x78] sm:$0xf]
        %v391 = vld [vmem:[%s4 + $0x7c] sm:$0xf]
        %v392 = vld [vmem:[%s4 + $0x80] sm:$0xf]
        %v393 = vld [vmem:[%s4 + $0x84] sm:$0xf]
        %v394 = vld [vmem:[%s4 + $0x88] sm:$0xf]
        %v395 = vld [vmem:[%s4 + $0x8c] sm:$0xf]
        %v396 = vld [vmem:[%s4 + $0x90] sm:$0xf]
        %v397 = vld [vmem:[%s4 + $0x94] sm:$0xf]
        %v398 = vld [vmem:[%s4 + $0x98] sm:$0xf]
        %v399 = vld [vmem:[%s4 + $0x9c] sm:$0xf]
        %v400 = vld [vmem:[%s4 + $0xa0] sm:$0xf]
        %v401 = vld [vmem:[%s4 + $0xa4] sm:$0xf]
        %v402 = vld [vmem:[%s4 + $0xa8] sm:$0xf]
        %v403 = vld [vmem:[%s4 + $0xac] sm:$0xf]
        %v404 = vld [vmem:[%s4 + $0xb0] sm:$0xf]
        %v405 = vld [vmem:[%s4 + $0xb4] sm:$0xf]
        %v406 = vld [vmem:[%s4 + $0xb8] sm:$0xf]
        %v407 = vld [vmem:[%s4 + $0xbc] sm:$0xf]
        %v408 = vpack.c.bf16 %v349, %v349
        %v413 = vunpack.c.l.b16 %v352
        %v414 = vunpack.c.l.b16 %v353
        %v415 = vunpack.c.l.b16 %v354
        %v416 = vunpack.c.l.b16 %v355
        %v417 = vpack.c.b16 %v414, %v413
        %v418 = vpack.c.b16 %v416, %v415
        %vm421 = vcmask 261120
        %v423 = vsel %vm421, %v408, 0
        %425 = vmatpush.bf16.msra.mxu0 0
        %426 = vmatpush.bf16.msra.mxu0 0
        %427 = vmatpush.bf16.msra.mxu0 0
        %428 = vmatpush.bf16.msra.mxu0 0
        %429 = vmatpush.bf16.msra.mxu0 0
        %430 = vmatpush.bf16.msra.mxu0 0
        %431 = vmatpush.bf16.msra.mxu0 %v418
        %432 = vmatpush.bf16.msra.mxu0 %v417
        %433 = vmatmul.bf16.gmra.mxu0 %v423
        %v434 = vpop.f32.mrf.mxu0
        %v435 = vadd.f32 0.0, %v434
        %v436 = vpop.f32.mrf.mxu0
        %437 = vdwg.mxu0
        %v438 = vpack.c.bf16 %v351, %v350
        %v443 = vunpack.c.l.b16 %v356
        %v444 = vunpack.c.h.b16 %v356
        %v445 = vunpack.c.l.b16 %v357
        %v446 = vunpack.c.h.b16 %v357
        %v447 = vunpack.c.l.b16 %v358
        %v448 = vunpack.c.h.b16 %v358
        %v449 = vunpack.c.l.b16 %v359
        %v450 = vunpack.c.h.b16 %v359
        %v451 = vpack.c.b16 %v445, %v443
        %v452 = vpack.c.b16 %v446, %v444
        %v453 = vpack.c.b16 %v449, %v447
        %v454 = vpack.c.b16 %v450, %v448
        %v460 = vsel %vm421, %v438, 0
        %462 = vmatpush.bf16.msra.mxu0 0
        %463 = vmatpush.bf16.msra.mxu0 0
        %464 = vmatpush.bf16.msra.mxu0 0
        %465 = vmatpush.bf16.msra.mxu0 0
        %466 = vmatpush.bf16.msra.mxu0 0
        %467 = vmatpush.bf16.msra.mxu0 0
        %468 = vmatpush.bf16.msra.mxu0 %v453
        %469 = vmatpush.bf16.msra.mxu0 %v451
        %470 = vmatmul.bf16.gmra.mxu0 %v460
        %v471 = vpop.f32.mrf.mxu0
        %v472 = vadd.f32 0.0, %v471
        %v473 = vpop.f32.mrf.mxu0
        %v474 = vadd.f32 0.0, %v473
        %475 = vdwg.mxu0
        %476 = vmatpush.bf16.msra.mxu0 0
        %477 = vmatpush.bf16.msra.mxu0 0
        %478 = vmatpush.bf16.msra.mxu0 0
        %479 = vmatpush.bf16.msra.mxu0 0
        %480 = vmatpush.bf16.msra.mxu0 0
        %481 = vmatpush.bf16.msra.mxu0 0
        %482 = vmatpush.bf16.msra.mxu0 %v454
        %483 = vmatpush.bf16.msra.mxu0 %v452
        %484 = vmatmul.bf16.gmra.mxu0 %v460
        %v485 = vpop.f32.mrf.mxu0
        %v486 = vadd.f32 0.0, %v485
        %v487 = vpop.f32.mrf.mxu0
        %v488 = vadd.f32 0.0, %v487
        %489 = vdwg.mxu0
        %v490 = vlaneseq
        %v491 = vand.u32 %v490, 127
        %v492 = vadd.s32 %v491, 128
        %v493 = vadd.s32 %v491, 256
        %vm494 = vcmp.lt.s32.totalorder %v491, 266
        %vm495 = vcmp.lt.s32.totalorder %v492, 266
        %vm496 = vcmp.lt.s32.totalorder %v493, 266
        %v497 = vsel %vm494, 1, 0
        %v498 = vsel %vm495, 1, 0
        %v499 = vsel %vm496, 1, 0
        %v500 = vcvt.s32.f32 %v497
        %v501 = vcvt.s32.f32 %v498
        %v502 = vcvt.s32.f32 %v499
        %v503 = vmul.f32 %v435, 0.35355338
        %v504 = vpack.c.bf16 %v503, %v503
        %v553 = vunpack.c.l.b16 %v360
        %v554 = vunpack.c.l.b16 %v361
        %v555 = vunpack.c.l.b16 %v362
        %v556 = vunpack.c.l.b16 %v363
        %v557 = vunpack.c.l.b16 %v364
        %v558 = vunpack.c.l.b16 %v365
        %v559 = vunpack.c.l.b16 %v366
        %v560 = vunpack.c.l.b16 %v367
        %v561 = vunpack.c.l.b16 %v368
        %v562 = vunpack.c.l.b16 %v369
        %v563 = vunpack.c.l.b16 %v370
        %v564 = vunpack.c.l.b16 %v371
        %v565 = vunpack.c.l.b16 %v372
        %v566 = vunpack.c.l.b16 %v373
        %v567 = vunpack.c.l.b16 %v374
        %v568 = vunpack.c.l.b16 %v375
        %v569 = vunpack.c.l.b16 %v376
        %v570 = vunpack.c.l.b16 %v377
        %v571 = vunpack.c.l.b16 %v378
        %v572 = vunpack.c.l.b16 %v379
        %v573 = vunpack.c.l.b16 %v380
        %v574 = vunpack.c.l.b16 %v381
        %v575 = vunpack.c.l.b16 %v382
        %v576 = vunpack.c.l.b16 %v383
        %v577 = vunpack.c.l.b16 %v384
        %v578 = vunpack.c.l.b16 %v385
        %v579 = vunpack.c.l.b16 %v386
        %v580 = vunpack.c.l.b16 %v387
        %v581 = vunpack.c.l.b16 %v388
        %v582 = vunpack.c.l.b16 %v389
        %v583 = vunpack.c.l.b16 %v390
        %v584 = vunpack.c.l.b16 %v391
        %v585 = vunpack.c.l.b16 %v392
        %v586 = vunpack.c.l.b16 %v393
        %v587 = vunpack.c.l.b16 %v394
        %v588 = vunpack.c.l.b16 %v395
        %v589 = vunpack.c.l.b16 %v396
        %v590 = vunpack.c.l.b16 %v397
        %v591 = vunpack.c.l.b16 %v398
        %v592 = vunpack.c.l.b16 %v399
        %v593 = vunpack.c.l.b16 %v400
        %v594 = vunpack.c.l.b16 %v401
        %v595 = vunpack.c.l.b16 %v402
        %v596 = vunpack.c.l.b16 %v403
        %v597 = vunpack.c.l.b16 %v404
        %v598 = vunpack.c.l.b16 %v405
        %v599 = vunpack.c.l.b16 %v406
        %v600 = vunpack.c.l.b16 %v407
        %v601 = vpack.c.b16 %v554, %v553
        %v602 = vpack.c.b16 %v556, %v555
        %v603 = vpack.c.b16 %v558, %v557
        %v604 = vpack.c.b16 %v560, %v559
        %v605 = vpack.c.b16 %v562, %v561
        %v606 = vpack.c.b16 %v564, %v563
        %v607 = vpack.c.b16 %v566, %v565
        %v608 = vpack.c.b16 %v568, %v567
        %v609 = vpack.c.b16 %v570, %v569
        %v610 = vpack.c.b16 %v572, %v571
        %v611 = vpack.c.b16 %v574, %v573
        %v612 = vpack.c.b16 %v576, %v575
        %v613 = vpack.c.b16 %v578, %v577
        %v614 = vpack.c.b16 %v580, %v579
        %v615 = vpack.c.b16 %v582, %v581
        %v616 = vpack.c.b16 %v584, %v583
        %v617 = vpack.c.b16 %v586, %v585
        %v618 = vpack.c.b16 %v588, %v587
        %v619 = vpack.c.b16 %v590, %v589
        %v620 = vpack.c.b16 %v592, %v591
        %v621 = vpack.c.b16 %v594, %v593
        %v622 = vpack.c.b16 %v596, %v595
        %v623 = vpack.c.b16 %v598, %v597
        %v624 = vpack.c.b16 %v600, %v599
        %vm625 = vcmask 523264
        %v627 = vsel %vm625, %v504, 0
        %v630 = vsel %vm625, %v601, 0
        %v633 = vsel %vm625, %v602, 0
        %v636 = vsel %vm625, %v603, 0
        %v639 = vsel %vm625, %v604, 0
        %v642 = vsel %vm625, %v605, 0
        %v645 = vsel %vm625, %v606, 0
        %v648 = vsel %vm625, %v607, 0
        %v651 = vsel %vm625, %v608, 0
        %v654 = vsel %vm625, %v609, 0
        %v657 = vsel %vm625, %v610, 0
        %v660 = vsel %vm625, %v611, 0
        %v663 = vsel %vm625, %v612, 0
        %v666 = vsel %vm625, %v613, 0
        %v669 = vsel %vm625, %v614, 0
        %v672 = vsel %vm625, %v615, 0
        %v675 = vsel %vm625, %v616, 0
        %v678 = vsel %vm625, %v617, 0
        %v681 = vsel %vm625, %v618, 0
        %v684 = vsel %vm625, %v619, 0
        %v687 = vsel %vm625, %v620, 0
        %v690 = vsel %vm625, %v621, 0
        %v693 = vsel %vm625, %v622, 0
        %v696 = vsel %vm625, %v623, 0
        %v699 = vsel %vm625, %v624, 0
        %701 = vmatpush.bf16.xpose.msra.mxu0 %v651
        %702 = vmatpush.bf16.xpose.msra.mxu0 %v648
        %703 = vmatpush.bf16.xpose.msra.mxu0 %v645
        %704 = vmatpush.bf16.xpose.msra.mxu0 %v642
        %705 = vmatpush.bf16.xpose.msra.mxu0 %v639
        %706 = vmatpush.bf16.xpose.msra.mxu0 %v636
        %707 = vmatpush.bf16.xpose.msra.mxu0 %v633
        %708 = vmatpush.bf16.xpose.msra.mxu0 %v630
        %709 = vmatmul.bf16.gmra.mxu0 %v627
        %v710 = vpop.f32.mrf.mxu0
        %v711 = vadd.f32 0.0, %v710
        %v712 = vpop.f32.mrf.mxu0
        %713 = vdwg.mxu0
        %714 = vmatpush.bf16.xpose.msra.mxu0 %v675
        %715 = vmatpush.bf16.xpose.msra.mxu0 %v672
        %716 = vmatpush.bf16.xpose.msra.mxu0 %v669
        %717 = vmatpush.bf16.xpose.msra.mxu0 %v666
        %718 = vmatpush.bf16.xpose.msra.mxu0 %v663
        %719 = vmatpush.bf16.xpose.msra.mxu0 %v660
        %720 = vmatpush.bf16.xpose.msra.mxu0 %v657
        %721 = vmatpush.bf16.xpose.msra.mxu0 %v654
        %722 = vmatmul.bf16.gmra.mxu0 %v627
        %v723 = vpop.f32.mrf.mxu0
        %v724 = vadd.f32 0.0, %v723
        %v725 = vpop.f32.mrf.mxu0
        %726 = vdwg.mxu0
        %727 = vmatpush.bf16.xpose.msra.mxu0 %v699
        %728 = vmatpush.bf16.xpose.msra.mxu0 %v696
        %729 = vmatpush.bf16.xpose.msra.mxu0 %v693
        %730 = vmatpush.bf16.xpose.msra.mxu0 %v690
        %731 = vmatpush.bf16.xpose.msra.mxu0 %v687
        %732 = vmatpush.bf16.xpose.msra.mxu0 %v684
        %733 = vmatpush.bf16.xpose.msra.mxu0 %v681
        %734 = vmatpush.bf16.xpose.msra.mxu0 %v678
        %735 = vmatmul.bf16.gmra.mxu0 %v627
        %v736 = vpop.f32.mrf.mxu0
        %v737 = vadd.f32 0.0, %v736
        %v738 = vpop.f32.mrf.mxu0
        %739 = vdwg.mxu0
        %v740 = vmul.f32 %v472, 0.35355338
        %v741 = vmul.f32 %v474, 0.35355338
        %v742 = vpack.c.bf16 %v741, %v740
        %v744 = vsel %vm625, %v742, 0
        %746 = vmatpush.bf16.xpose.msra.mxu0 %v651
        %747 = vmatpush.bf16.xpose.msra.mxu0 %v648
        %748 = vmatpush.bf16.xpose.msra.mxu0 %v645
        %749 = vmatpush.bf16.xpose.msra.mxu0 %v642
        %750 = vmatpush.bf16.xpose.msra.mxu0 %v639
        %751 = vmatpush.bf16.xpose.msra.mxu0 %v636
        %752 = vmatpush.bf16.xpose.msra.mxu0 %v633
        %753 = vmatpush.bf16.xpose.msra.mxu0 %v630
        %754 = vmatmul.bf16.gmra.mxu0 %v744
        %v755 = vpop.f32.mrf.mxu0
        %v756 = vadd.f32 0.0, %v755
        %v757 = vpop.f32.mrf.mxu0
        %v758 = vadd.f32 0.0, %v757
        %759 = vdwg.mxu0
        %760 = vmatpush.bf16.xpose.msra.mxu0 %v675
        %761 = vmatpush.bf16.xpose.msra.mxu0 %v672
        %762 = vmatpush.bf16.xpose.msra.mxu0 %v669
        %763 = vmatpush.bf16.xpose.msra.mxu0 %v666
        %764 = vmatpush.bf16.xpose.msra.mxu0 %v663
        %765 = vmatpush.bf16.xpose.msra.mxu0 %v660
        %766 = vmatpush.bf16.xpose.msra.mxu0 %v657
        %767 = vmatpush.bf16.xpose.msra.mxu0 %v654
        %768 = vmatmul.bf16.gmra.mxu0 %v744
        %v769 = vpop.f32.mrf.mxu0
        %v770 = vadd.f32 0.0, %v769
        %v771 = vpop.f32.mrf.mxu0
        %v772 = vadd.f32 0.0, %v771
        %773 = vdwg.mxu0
        %774 = vmatpush.bf16.xpose.msra.mxu0 %v699
        %775 = vmatpush.bf16.xpose.msra.mxu0 %v696
        %776 = vmatpush.bf16.xpose.msra.mxu0 %v693
        %777 = vmatpush.bf16.xpose.msra.mxu0 %v690
        %778 = vmatpush.bf16.xpose.msra.mxu0 %v687
        %779 = vmatpush.bf16.xpose.msra.mxu0 %v684
        %780 = vmatpush.bf16.xpose.msra.mxu0 %v681
        %781 = vmatpush.bf16.xpose.msra.mxu0 %v678
        %782 = vmatmul.bf16.gmra.mxu0 %v744
        %v783 = vpop.f32.mrf.mxu0
        %v784 = vadd.f32 0.0, %v783
        %v785 = vpop.f32.mrf.mxu0
        %v786 = vadd.f32 0.0, %v785
        %787 = vdwg.mxu0
        %v788 = vmul.f32 %v435, %v435
        %v789 = vsel %vm625, %v788, 0.0
        %790 = vadd.xlane.f32.xlu0 %v789
        %v791 = vpop.xlane.xlu0 %790
        %v792 = vmul.f32 %v791, 0.0625
        %v793 = vmul.f32 %v472, %v472
        %v794 = vmul.f32 %v474, %v474
        %v795 = vsel %vm625, %v793, 0.0
        %796 = vadd.xlane.f32.xlu0 %v795
        %v797 = vpop.xlane.xlu0 %796
        %v798 = vsel %vm625, %v794, 0.0
        %799 = vadd.xlane.f32.xlu0 %v798
        %v800 = vpop.xlane.xlu0 %799
        %v801 = vmul.f32 %v797, 0.0625
        %v802 = vmul.f32 %v800, 0.0625
        %vm803 = vcmp.eq.s32.totalorder %v497, 1
        %vm804 = vcmp.eq.s32.totalorder %v498, 1
        %vm805 = vcmp.eq.s32.totalorder %v499, 1
        %v806 = vsel %vm803, %v711, -1e+30
        %v807 = vsel %vm804, %v724, -1e+30
        %v808 = vsel %vm805, %v737, -1e+30
        %v809 = vmax.f32 %v806, %v807
        %v810 = vmax.f32 %v809, %v808
        %811 = vmax.xlane.f32.xlu0 %v810
        %v812 = vpop.xlane.xlu0 %811
        %v813 = vsel %vm803, %v756, -1e+30
        %v814 = vsel %vm804, %v770, -1e+30
        %v815 = vsel %vm805, %v784, -1e+30
        %v816 = vsel %vm803, %v758, -1e+30
        %v817 = vsel %vm804, %v772, -1e+30
        %v818 = vsel %vm805, %v786, -1e+30
        %v819 = vmax.f32 %v813, %v817
        %v820 = vmax.f32 %v814, %v818
        %v821 = vmax.f32 %v819, %v820
        %v822 = vmax.f32 %v815, %v816
        %v823 = vmax.f32 %v821, %v822
        %824 = vmax.xlane.f32.xlu0 %v823
        %v825 = vpop.xlane.xlu0 %824
        %v826 = vrot.slane %v825, 4
        %v827 = vmax.f32 %v825, %v826
        %v828 = vrot.slane %v827, 2
        %v829 = vmax.f32 %v827, %v828
        %v830 = vrot.slane %v829, 1
        %v831 = vmax.f32 %v829, %v830
        %s832 = vtos %v831
        %v833 = vsub.f32 %v711, %v792
        %v834 = vsub.f32 %v724, %v792
        %v835 = vsub.f32 %v737, %v792
        %v836 = vsub.f32 %v833, %v812
        %v837 = vsub.f32 %v834, %v812
        %v838 = vsub.f32 %v835, %v812
        %v839 = vsel %vm803, %v836, 0.0
        %v840 = vsel %vm804, %v837, 0.0
        %v841 = vsel %vm805, %v838, 0.0
        %v842 = vmul.f32 %v839, 1.442695
        %v843 = vpow.pop %v842
        %v844 = vmul.f32 %v840, 1.442695
        %v845 = vpow.pop %v844
        %v846 = vmul.f32 %v841, 1.442695
        %v847 = vpow.pop %v846
        %v848 = vadd.f32 %v843, 0.0001
        %v849 = vadd.f32 %v845, 0.0001
        %v850 = vadd.f32 %v847, 0.0001
        %v851 = vmul.f32 %v848, 0.061313935
        %v852 = vmul.f32 %v849, 0.061313935
        %v853 = vmul.f32 %v850, 0.061313935
        %v854 = vmul.f32 %v500, %v851
        %v855 = vmul.f32 %v501, %v852
        %v856 = vmul.f32 %v502, %v853
        %v857 = vsub.f32 %v756, %v801
        %v858 = vsub.f32 %v770, %v801
        %v859 = vsub.f32 %v784, %v801
        %v860 = vsub.f32 %v758, %v802
        %v861 = vsub.f32 %v772, %v802
        %v862 = vsub.f32 %v786, %v802
        %v863 = vstv %s832
        %v864 = vsub.f32 %v857, %v863
        %v865 = vsub.f32 %v858, %v863
        %v866 = vsub.f32 %v859, %v863
        %v867 = vsub.f32 %v860, %v863
        %v868 = vsub.f32 %v861, %v863
        %v869 = vsub.f32 %v862, %v863
        %v870 = vsel %vm803, %v864, 0.0
        %v871 = vsel %vm804, %v865, 0.0
        %v872 = vsel %vm805, %v866, 0.0
        %v873 = vsel %vm803, %v867, 0.0
        %v874 = vsel %vm804, %v868, 0.0
        %v875 = vsel %vm805, %v869, 0.0
        %v876 = vmul.f32 %v870, 1.442695
        %v877 = vpow.pop %v876
        %v878 = vmul.f32 %v871, 1.442695
        %v879 = vpow.pop %v878
        %v880 = vmul.f32 %v872, 1.442695
        %v881 = vpow.pop %v880
        %v882 = vmul.f32 %v873, 1.442695
        %v883 = vpow.pop %v882
        %v884 = vmul.f32 %v874, 1.442695
        %v885 = vpow.pop %v884
        %v886 = vmul.f32 %v875, 1.442695
        %v887 = vpow.pop %v886
        %v888 = vadd.f32 %v877, 0.0001
        %v889 = vadd.f32 %v879, 0.0001
        %v890 = vadd.f32 %v881, 0.0001
        %v891 = vadd.f32 %v883, 0.0001
        %v892 = vadd.f32 %v885, 0.0001
        %v893 = vadd.f32 %v887, 0.0001
        %v894 = vmul.f32 %v888, 0.061313935
        %v895 = vmul.f32 %v889, 0.061313935
        %v896 = vmul.f32 %v890, 0.061313935
        %v897 = vmul.f32 %v891, 0.061313935
        %v898 = vmul.f32 %v892, 0.061313935
        %v899 = vmul.f32 %v893, 0.061313935
        %v900 = vmul.f32 %v500, %v894
        %v901 = vmul.f32 %v501, %v895
        %v902 = vmul.f32 %v502, %v896
        %v903 = vmul.f32 %v500, %v897
        %v904 = vmul.f32 %v501, %v898
        %v905 = vmul.f32 %v502, %v899
        %v906 = vadd.f32 %v900, %v903
        %v907 = vrot.slane %v906, 4
        %v908 = vadd.f32 %v906, %v907
        %v909 = vrot.slane %v908, 2
        %v910 = vadd.f32 %v908, %v909
        %v911 = vrot.slane %v910, 1
        %v912 = vadd.f32 %v910, %v911
        %v913 = vadd.f32 %v901, %v904
        %v914 = vrot.slane %v913, 4
        %v915 = vadd.f32 %v913, %v914
        %v916 = vrot.slane %v915, 2
        %v917 = vadd.f32 %v915, %v916
        %v918 = vrot.slane %v917, 1
        %v919 = vadd.f32 %v917, %v918
        %v920 = vadd.f32 %v902, %v905
        %v921 = vrot.slane %v920, 4
        %v922 = vadd.f32 %v920, %v921
        %v923 = vrot.slane %v922, 2
        %v924 = vadd.f32 %v922, %v923
        %v925 = vrot.slane %v924, 1
        %v926 = vadd.f32 %v924, %v925
        %v927 = vmul.f32 %v854, %v912
        %v928 = vmul.f32 %v855, %v919
        %v929 = vmul.f32 %v856, %v926
        %v930 = vadd.f32 %v927, %v928
        %v931 = vadd.f32 %v930, %v929
        %932 = vadd.xlane.f32.xlu0 %v931
        %v933 = vpop.xlane.xlu0 %932
        %v934 = vrcp.pop %v933
        %v935 = vpack.c.bf16 %v903, %v900
        %v936 = vpack.c.bf16 %v904, %v901
        %v937 = vpack.c.bf16 %v905, %v902
        %v938 = vpack.c.bf16 %v488, %v486
        %939 = vxpose.binary.xlu0.c.b16.start [1/16] %v936, %v935, 128
        %940 = vxpose.binary.xlu0.c.b16.cont [2/16] 0, 0, 128
        %941 = vxpose.binary.xlu0.c.b16.cont [3/16] 0, 0, 128
        %942 = vxpose.binary.xlu0.c.b16.cont [4/16] 0, 0, 128
        %943 = vxpose.binary.xlu0.c.b16.cont [5/16] 0, 0, 128
        %944 = vxpose.binary.xlu0.c.b16.cont [6/16] 0, 0, 128
        %945 = vxpose.binary.xlu0.c.b16.cont [7/16] 0, 0, 128
        %946 = vxpose.binary.xlu0.c.b16.end [8/16] 0, 0, 128
        %v947 = vpop.trf.xlu0
        %v948 = vpop.trf.xlu0
        %v949 = vpop.trf.xlu0
        %v950 = vpop.trf.xlu0
        %v951 = vpop.trf.xlu0
        %v952 = vpop.trf.xlu0
        %v953 = vpop.trf.xlu0
        %v954 = vpop.trf.xlu0
        %v955 = vpop.trf.xlu0
        %v956 = vpop.trf.xlu0
        %v957 = vpop.trf.xlu0
        %v958 = vpop.trf.xlu0
        %v959 = vpop.trf.xlu0
        %v960 = vpop.trf.xlu0
        %v961 = vpop.trf.xlu0
        %v962 = vpop.trf.xlu0
        %963 = vxpose.xlu0.c.b16.start [1/8] %v937, 128
        %964 = vxpose.xlu0.c.b16.cont [2/8] 0, 128
        %965 = vxpose.xlu0.c.b16.cont [3/8] 0, 128
        %966 = vxpose.xlu0.c.b16.cont [4/8] 0, 128
        %967 = vxpose.xlu0.c.b16.cont [5/8] 0, 128
        %968 = vxpose.xlu0.c.b16.cont [6/8] 0, 128
        %969 = vxpose.xlu0.c.b16.cont [7/8] 0, 128
        %970 = vxpose.xlu0.c.b16.end [8/8] 0, 128
        %v971 = vpop.trf.xlu0
        %v972 = vpop.trf.xlu0
        %v973 = vpop.trf.xlu0
        %v974 = vpop.trf.xlu0
        %v975 = vpop.trf.xlu0
        %v976 = vpop.trf.xlu0
        %v977 = vpop.trf.xlu0
        %v978 = vpop.trf.xlu0
        %vm979 = vcmask 130048
        %v981 = vsel %vm979, %v947, 0
        %v984 = vsel %vm979, %v949, 0
        %v987 = vsel %vm979, %v951, 0
        %v990 = vsel %vm979, %v953, 0
        %v993 = vsel %vm979, %v955, 0
        %v996 = vsel %vm979, %v957, 0
        %v999 = vsel %vm979, %v959, 0
        %v1002 = vsel %vm979, %v961, 0
        %v1005 = vsel %vm979, %v948, 0
        %v1008 = vsel %vm979, %v950, 0
        %v1011 = vsel %vm979, %v952, 0
        %v1014 = vsel %vm979, %v954, 0
        %v1017 = vsel %vm979, %v956, 0
        %v1020 = vsel %vm979, %v958, 0
        %v1023 = vsel %vm979, %v960, 0
        %v1026 = vsel %vm979, %v962, 0
        %v1029 = vsel %vm979, %v971, 0
        %v1032 = vsel %vm979, %v972, 0
        %v1035 = vsel %vm979, %v973, 0
        %v1038 = vsel %vm979, %v974, 0
        %v1041 = vsel %vm979, %v975, 0
        %v1044 = vsel %vm979, %v976, 0
        %v1047 = vsel %vm979, %v977, 0
        %v1050 = vsel %vm979, %v978, 0
        %1052 = vmatpush.bf16.msra.mxu0 0
        %1053 = vmatpush.bf16.msra.mxu0 0
        %1054 = vmatpush.bf16.msra.mxu0 0
        %1055 = vmatpush.bf16.msra.mxu0 0
        %1056 = vmatpush.bf16.msra.mxu0 0
        %1057 = vmatpush.bf16.msra.mxu0 0
        %1058 = vmatpush.bf16.msra.mxu0 0
        %1059 = vmatpush.bf16.msra.mxu0 %v938
        %1060 = vmatmul.bf16.gmra.mxu0 %v981
        %v1061 = vpop.f32.mrf.mxu0
        %v1062 = vadd.f32 0.0, %v1061
        %v1063 = vpop.f32.mrf.mxu0
        %v1064 = vadd.f32 0.0, %v1063
        %1065 = vmatmul.bf16.gmra.mxu0 %v984
        %v1066 = vpop.f32.mrf.mxu0
        %v1067 = vadd.f32 0.0, %v1066
        %v1068 = vpop.f32.mrf.mxu0
        %v1069 = vadd.f32 0.0, %v1068
        %1070 = vmatmul.bf16.gmra.mxu0 %v987
        %v1071 = vpop.f32.mrf.mxu0
        %v1072 = vadd.f32 0.0, %v1071
        %v1073 = vpop.f32.mrf.mxu0
        %v1074 = vadd.f32 0.0, %v1073
        %1075 = vmatmul.bf16.gmra.mxu0 %v990
        %v1076 = vpop.f32.mrf.mxu0
        %v1077 = vadd.f32 0.0, %v1076
        %v1078 = vpop.f32.mrf.mxu0
        %v1079 = vadd.f32 0.0, %v1078
        %1080 = vmatmul.bf16.gmra.mxu0 %v993
        %v1081 = vpop.f32.mrf.mxu0
        %v1082 = vadd.f32 0.0, %v1081
        %v1083 = vpop.f32.mrf.mxu0
        %v1084 = vadd.f32 0.0, %v1083
        %1085 = vmatmul.bf16.gmra.mxu0 %v996
        %v1086 = vpop.f32.mrf.mxu0
        %v1087 = vadd.f32 0.0, %v1086
        %v1088 = vpop.f32.mrf.mxu0
        %v1089 = vadd.f32 0.0, %v1088
        %1090 = vmatmul.bf16.gmra.mxu0 %v999
        %v1091 = vpop.f32.mrf.mxu0
        %v1092 = vadd.f32 0.0, %v1091
        %v1093 = vpop.f32.mrf.mxu0
        %v1094 = vadd.f32 0.0, %v1093
        %1095 = vmatmul.bf16.gmra.mxu0 %v1002
        %v1096 = vpop.f32.mrf.mxu0
        %v1097 = vadd.f32 0.0, %v1096
        %v1098 = vpop.f32.mrf.mxu0
        %v1099 = vadd.f32 0.0, %v1098
        %1100 = vmatmul.bf16.gmra.mxu0 %v1005
        %v1101 = vpop.f32.mrf.mxu0
        %v1102 = vadd.f32 0.0, %v1101
        %v1103 = vpop.f32.mrf.mxu0
        %v1104 = vadd.f32 0.0, %v1103
        %1105 = vmatmul.bf16.gmra.mxu0 %v1008
        %v1106 = vpop.f32.mrf.mxu0
        %v1107 = vadd.f32 0.0, %v1106
        %v1108 = vpop.f32.mrf.mxu0
        %v1109 = vadd.f32 0.0, %v1108
        %1110 = vmatmul.bf16.gmra.mxu0 %v1011
        %v1111 = vpop.f32.mrf.mxu0
        %v1112 = vadd.f32 0.0, %v1111
        %v1113 = vpop.f32.mrf.mxu0
        %v1114 = vadd.f32 0.0, %v1113
        %1115 = vmatmul.bf16.gmra.mxu0 %v1014
        %v1116 = vpop.f32.mrf.mxu0
        %v1117 = vadd.f32 0.0, %v1116
        %v1118 = vpop.f32.mrf.mxu0
        %v1119 = vadd.f32 0.0, %v1118
        %1120 = vmatmul.bf16.gmra.mxu0 %v1017
        %v1121 = vpop.f32.mrf.mxu0
        %v1122 = vadd.f32 0.0, %v1121
        %v1123 = vpop.f32.mrf.mxu0
        %v1124 = vadd.f32 0.0, %v1123
        %1125 = vmatmul.bf16.gmra.mxu0 %v1020
        %v1126 = vpop.f32.mrf.mxu0
        %v1127 = vadd.f32 0.0, %v1126
        %v1128 = vpop.f32.mrf.mxu0
        %v1129 = vadd.f32 0.0, %v1128
        %1130 = vmatmul.bf16.gmra.mxu0 %v1023
        %v1131 = vpop.f32.mrf.mxu0
        %v1132 = vadd.f32 0.0, %v1131
        %v1133 = vpop.f32.mrf.mxu0
        %v1134 = vadd.f32 0.0, %v1133
        %1135 = vmatmul.bf16.gmra.mxu0 %v1026
        %v1136 = vpop.f32.mrf.mxu0
        %v1137 = vadd.f32 0.0, %v1136
        %v1138 = vpop.f32.mrf.mxu0
        %v1139 = vadd.f32 0.0, %v1138
        %1140 = vmatmul.bf16.gmra.mxu0 %v1029
        %v1141 = vpop.f32.mrf.mxu0
        %v1142 = vadd.f32 0.0, %v1141
        %v1143 = vpop.f32.mrf.mxu0
        %v1144 = vadd.f32 0.0, %v1143
        %1145 = vmatmul.bf16.gmra.mxu0 %v1032
        %v1146 = vpop.f32.mrf.mxu0
        %v1147 = vadd.f32 0.0, %v1146
        %v1148 = vpop.f32.mrf.mxu0
        %v1149 = vadd.f32 0.0, %v1148
        %1150 = vmatmul.bf16.gmra.mxu0 %v1035
        %v1151 = vpop.f32.mrf.mxu0
        %v1152 = vadd.f32 0.0, %v1151
        %v1153 = vpop.f32.mrf.mxu0
        %v1154 = vadd.f32 0.0, %v1153
        %1155 = vmatmul.bf16.gmra.mxu0 %v1038
        %v1156 = vpop.f32.mrf.mxu0
        %v1157 = vadd.f32 0.0, %v1156
        %v1158 = vpop.f32.mrf.mxu0
        %v1159 = vadd.f32 0.0, %v1158
        %1160 = vmatmul.bf16.gmra.mxu0 %v1041
        %v1161 = vpop.f32.mrf.mxu0
        %v1162 = vadd.f32 0.0, %v1161
        %v1163 = vpop.f32.mrf.mxu0
        %v1164 = vadd.f32 0.0, %v1163
        %1165 = vmatmul.bf16.gmra.mxu0 %v1044
        %v1166 = vpop.f32.mrf.mxu0
        %v1167 = vadd.f32 0.0, %v1166
        %v1168 = vpop.f32.mrf.mxu0
        %v1169 = vadd.f32 0.0, %v1168
        %1170 = vmatmul.bf16.gmra.mxu0 %v1047
        %v1171 = vpop.f32.mrf.mxu0
        %v1172 = vadd.f32 0.0, %v1171
        %v1173 = vpop.f32.mrf.mxu0
        %v1174 = vadd.f32 0.0, %v1173
        %1175 = vmatmul.bf16.gmra.mxu0 %v1050
        %v1176 = vpop.f32.mrf.mxu0
        %v1177 = vadd.f32 0.0, %v1176
        %v1178 = vpop.f32.mrf.mxu0
        %v1179 = vadd.f32 0.0, %v1178
        %1180 = vdwg.mxu0
        %v1181 = vpack.c.bf16 %v854, %v854
        %v1182 = vpack.c.bf16 %v855, %v855
        %v1183 = vpack.c.bf16 %v856, %v856
        %v1184 = vpack.c.bf16 %v1064, %v1062
        %v1185 = vpack.c.bf16 %v1069, %v1067
        %v1186 = vpack.c.bf16 %v1074, %v1072
        %v1187 = vpack.c.bf16 %v1079, %v1077
        %v1188 = vpack.c.bf16 %v1084, %v1082
        %v1189 = vpack.c.bf16 %v1089, %v1087
        %v1190 = vpack.c.bf16 %v1094, %v1092
        %v1191 = vpack.c.bf16 %v1099, %v1097
        %v1192 = vpack.c.bf16 %v1104, %v1102
        %v1193 = vpack.c.bf16 %v1109, %v1107
        %v1194 = vpack.c.bf16 %v1114, %v1112
        %v1195 = vpack.c.bf16 %v1119, %v1117
        %v1196 = vpack.c.bf16 %v1124, %v1122
        %v1197 = vpack.c.bf16 %v1129, %v1127
        %v1198 = vpack.c.bf16 %v1134, %v1132
        %v1199 = vpack.c.bf16 %v1139, %v1137
        %v1200 = vpack.c.bf16 %v1144, %v1142
        %v1201 = vpack.c.bf16 %v1149, %v1147
        %v1202 = vpack.c.bf16 %v1154, %v1152
        %v1203 = vpack.c.bf16 %v1159, %v1157
        %v1204 = vpack.c.bf16 %v1164, %v1162
        %v1205 = vpack.c.bf16 %v1169, %v1167
        %v1206 = vpack.c.bf16 %v1174, %v1172
        %v1207 = vpack.c.bf16 %v1179, %v1177
        %1208 = vmatpush.bf16.msra.mxu0 %v1191
        %1209 = vmatpush.bf16.msra.mxu0 %v1190
        %1210 = vmatpush.bf16.msra.mxu0 %v1189
        %1211 = vmatpush.bf16.msra.mxu0 %v1188
        %1212 = vmatpush.bf16.msra.mxu0 %v1187
        %1213 = vmatpush.bf16.msra.mxu0 %v1186
        %1214 = vmatpush.bf16.msra.mxu0 %v1185
        %1215 = vmatpush.bf16.msra.mxu0 %v1184
        %1216 = vmatmul.bf16.gmra.mxu0 %v1181
        %v1217 = vpop.f32.mrf.mxu0
        %v1218 = vadd.f32 0.0, %v1217
        %v1219 = vpop.f32.mrf.mxu0
        %1220 = vdwg.mxu0
        %1221 = vmatpush.bf16.msra.mxu0 %v1199
        %1222 = vmatpush.bf16.msra.mxu0 %v1198
        %1223 = vmatpush.bf16.msra.mxu0 %v1197
        %1224 = vmatpush.bf16.msra.mxu0 %v1196
        %1225 = vmatpush.bf16.msra.mxu0 %v1195
        %1226 = vmatpush.bf16.msra.mxu0 %v1194
        %1227 = vmatpush.bf16.msra.mxu0 %v1193
        %1228 = vmatpush.bf16.msra.mxu0 %v1192
        %1229 = vmatmul.bf16.gmra.mxu0 %v1182
        %v1230 = vpop.f32.mrf.mxu0
        %v1231 = vadd.f32 %v1218, %v1230
        %v1232 = vpop.f32.mrf.mxu0
        %1233 = vdwg.mxu0
        %1234 = vmatpush.bf16.msra.mxu0 %v1207
        %1235 = vmatpush.bf16.msra.mxu0 %v1206
        %1236 = vmatpush.bf16.msra.mxu0 %v1205
        %1237 = vmatpush.bf16.msra.mxu0 %v1204
        %1238 = vmatpush.bf16.msra.mxu0 %v1203
        %1239 = vmatpush.bf16.msra.mxu0 %v1202
        %1240 = vmatpush.bf16.msra.mxu0 %v1201
        %1241 = vmatpush.bf16.msra.mxu0 %v1200
        %1242 = vmatmul.bf16.gmra.mxu0 %v1183
        %v1243 = vpop.f32.mrf.mxu0
        %v1244 = vadd.f32 %v1231, %v1243
        %v1245 = vpop.f32.mrf.mxu0
        %1246 = vdwg.mxu0
        %v1247 = vmul.f32 %v1244, %v934
        %1249 = vrot.lane.b32.xlu0 %v504, 64
        %v1250 = vpop.permute.xlu0 %1249
        %v1252 = vsel %vm625, %v1250, 0
        %1254 = vmatpush.bf16.xpose.msra.mxu0 %v651
        %1255 = vmatpush.bf16.xpose.msra.mxu0 %v648
        %1256 = vmatpush.bf16.xpose.msra.mxu0 %v645
        %1257 = vmatpush.bf16.xpose.msra.mxu0 %v642
        %1258 = vmatpush.bf16.xpose.msra.mxu0 %v639
        %1259 = vmatpush.bf16.xpose.msra.mxu0 %v636
        %1260 = vmatpush.bf16.xpose.msra.mxu0 %v633
        %1261 = vmatpush.bf16.xpose.msra.mxu0 %v630
        %1262 = vmatmul.bf16.gmra.mxu0 %v1252
        %v1263 = vpop.f32.mrf.mxu0
        %v1264 = vadd.f32 0.0, %v1263
        %v1265 = vpop.f32.mrf.mxu0
        %1266 = vdwg.mxu0
        %1267 = vmatpush.bf16.xpose.msra.mxu0 %v675
        %1268 = vmatpush.bf16.xpose.msra.mxu0 %v672
        %1269 = vmatpush.bf16.xpose.msra.mxu0 %v669
        %1270 = vmatpush.bf16.xpose.msra.mxu0 %v666
        %1271 = vmatpush.bf16.xpose.msra.mxu0 %v663
        %1272 = vmatpush.bf16.xpose.msra.mxu0 %v660
        %1273 = vmatpush.bf16.xpose.msra.mxu0 %v657
        %1274 = vmatpush.bf16.xpose.msra.mxu0 %v654
        %1275 = vmatmul.bf16.gmra.mxu0 %v1252
        %v1276 = vpop.f32.mrf.mxu0
        %v1277 = vadd.f32 0.0, %v1276
        %v1278 = vpop.f32.mrf.mxu0
        %1279 = vdwg.mxu0
        %1280 = vmatpush.bf16.xpose.msra.mxu0 %v699
        %1281 = vmatpush.bf16.xpose.msra.mxu0 %v696
        %1282 = vmatpush.bf16.xpose.msra.mxu0 %v693
        %1283 = vmatpush.bf16.xpose.msra.mxu0 %v690
        %1284 = vmatpush.bf16.xpose.msra.mxu0 %v687
        %1285 = vmatpush.bf16.xpose.msra.mxu0 %v684
        %1286 = vmatpush.bf16.xpose.msra.mxu0 %v681
        %1287 = vmatpush.bf16.xpose.msra.mxu0 %v678
        %1288 = vmatmul.bf16.gmra.mxu0 %v1252
        %v1289 = vpop.f32.mrf.mxu0
        %v1290 = vadd.f32 0.0, %v1289
        %v1291 = vpop.f32.mrf.mxu0
        %1292 = vdwg.mxu0
        %1294 = vrot.lane.b32.xlu0 %v742, 64
        %v1295 = vpop.permute.xlu0 %1294
        %v1297 = vsel %vm625, %v1295, 0
        %1299 = vmatpush.bf16.xpose.msra.mxu0 %v651
        %1300 = vmatpush.bf16.xpose.msra.mxu0 %v648
        %1301 = vmatpush.bf16.xpose.msra.mxu0 %v645
        %1302 = vmatpush.bf16.xpose.msra.mxu0 %v642
        %1303 = vmatpush.bf16.xpose.msra.mxu0 %v639
        %1304 = vmatpush.bf16.xpose.msra.mxu0 %v636
        %1305 = vmatpush.bf16.xpose.msra.mxu0 %v633
        %1306 = vmatpush.bf16.xpose.msra.mxu0 %v630
        %1307 = vmatmul.bf16.gmra.mxu0 %v1297
        %v1308 = vpop.f32.mrf.mxu0
        %v1309 = vadd.f32 0.0, %v1308
        %v1310 = vpop.f32.mrf.mxu0
        %v1311 = vadd.f32 0.0, %v1310
        %1312 = vdwg.mxu0
        %1313 = vmatpush.bf16.xpose.msra.mxu0 %v675
        %1314 = vmatpush.bf16.xpose.msra.mxu0 %v672
        %1315 = vmatpush.bf16.xpose.msra.mxu0 %v669
        %1316 = vmatpush.bf16.xpose.msra.mxu0 %v666
        %1317 = vmatpush.bf16.xpose.msra.mxu0 %v663
        %1318 = vmatpush.bf16.xpose.msra.mxu0 %v660
        %1319 = vmatpush.bf16.xpose.msra.mxu0 %v657
        %1320 = vmatpush.bf16.xpose.msra.mxu0 %v654
        %1321 = vmatmul.bf16.gmra.mxu0 %v1297
        %v1322 = vpop.f32.mrf.mxu0
        %v1323 = vadd.f32 0.0, %v1322
        %v1324 = vpop.f32.mrf.mxu0
        %v1325 = vadd.f32 0.0, %v1324
        %1326 = vdwg.mxu0
        %1327 = vmatpush.bf16.xpose.msra.mxu0 %v699
        %1328 = vmatpush.bf16.xpose.msra.mxu0 %v696
        %1329 = vmatpush.bf16.xpose.msra.mxu0 %v693
        %1330 = vmatpush.bf16.xpose.msra.mxu0 %v690
        %1331 = vmatpush.bf16.xpose.msra.mxu0 %v687
        %1332 = vmatpush.bf16.xpose.msra.mxu0 %v684
        %1333 = vmatpush.bf16.xpose.msra.mxu0 %v681
        %1334 = vmatpush.bf16.xpose.msra.mxu0 %v678
        %1335 = vmatmul.bf16.gmra.mxu0 %v1297
        %v1336 = vpop.f32.mrf.mxu0
        %v1337 = vadd.f32 0.0, %v1336
        %v1338 = vpop.f32.mrf.mxu0
        %v1339 = vadd.f32 0.0, %v1338
        %1340 = vdwg.mxu0
        %1342 = vrot.lane.b32.xlu0 %v788, 64
        %v1343 = vpop.permute.xlu0 %1342
        %v1345 = vsel %vm625, %v1343, 0.0
        %1346 = vadd.xlane.f32.xlu0 %v1345
        %v1347 = vpop.xlane.xlu0 %1346
        %v1348 = vmul.f32 %v1347, 0.0625
        %1351 = vrot.lane.b32.xlu0 %v793, 64
        %v1352 = vpop.permute.xlu0 %1351
        %1353 = vrot.lane.b32.xlu0 %v794, 64
        %v1354 = vpop.permute.xlu0 %1353
        %v1357 = vsel %vm625, %v1352, 0.0
        %1358 = vadd.xlane.f32.xlu0 %v1357
        %v1359 = vpop.xlane.xlu0 %1358
        %v1360 = vsel %vm625, %v1354, 0.0
        %1361 = vadd.xlane.f32.xlu0 %v1360
        %v1362 = vpop.xlane.xlu0 %1361
        %v1363 = vmul.f32 %v1359, 0.0625
        %v1364 = vmul.f32 %v1362, 0.0625
        %v1365 = vsel %vm803, %v1264, -1e+30
        %v1366 = vsel %vm804, %v1277, -1e+30
        %v1367 = vsel %vm805, %v1290, -1e+30
        %v1368 = vmax.f32 %v1365, %v1366
        %v1369 = vmax.f32 %v1368, %v1367
        %1370 = vmax.xlane.f32.xlu0 %v1369
        %v1371 = vpop.xlane.xlu0 %1370
        %v1372 = vsel %vm803, %v1309, -1e+30
        %v1373 = vsel %vm804, %v1323, -1e+30
        %v1374 = vsel %vm805, %v1337, -1e+30
        %v1375 = vsel %vm803, %v1311, -1e+30
        %v1376 = vsel %vm804, %v1325, -1e+30
        %v1377 = vsel %vm805, %v1339, -1e+30
        %v1378 = vmax.f32 %v1372, %v1376
        %v1379 = vmax.f32 %v1373, %v1377
        %v1380 = vmax.f32 %v1378, %v1379
        %v1381 = vmax.f32 %v1374, %v1375
        %v1382 = vmax.f32 %v1380, %v1381
        %1383 = vmax.xlane.f32.xlu0 %v1382
        %v1384 = vpop.xlane.xlu0 %1383
        %v1385 = vrot.slane %v1384, 4
        %v1386 = vmax.f32 %v1384, %v1385
        %v1387 = vrot.slane %v1386, 2
        %v1388 = vmax.f32 %v1386, %v1387
        %v1389 = vrot.slane %v1388, 1
        %v1390 = vmax.f32 %v1388, %v1389
        %s1391 = vtos %v1390
        %v1392 = vsub.f32 %v1264, %v1348
        %v1393 = vsub.f32 %v1277, %v1348
        %v1394 = vsub.f32 %v1290, %v1348
        %v1395 = vsub.f32 %v1392, %v1371
        %v1396 = vsub.f32 %v1393, %v1371
        %v1397 = vsub.f32 %v1394, %v1371
        %v1398 = vsel %vm803, %v1395, 0.0
        %v1399 = vsel %vm804, %v1396, 0.0
        %v1400 = vsel %vm805, %v1397, 0.0
        %v1401 = vmul.f32 %v1398, 1.442695
        %v1402 = vpow.pop %v1401
        %v1403 = vmul.f32 %v1399, 1.442695
        %v1404 = vpow.pop %v1403
        %v1405 = vmul.f32 %v1400, 1.442695
        %v1406 = vpow.pop %v1405
        %v1407 = vadd.f32 %v1402, 0.0001
        %v1408 = vadd.f32 %v1404, 0.0001
        %v1409 = vadd.f32 %v1406, 0.0001
        %v1410 = vmul.f32 %v1407, 0.061313935
        %v1411 = vmul.f32 %v1408, 0.061313935
        %v1412 = vmul.f32 %v1409, 0.061313935
        %v1413 = vmul.f32 %v500, %v1410
        %v1414 = vmul.f32 %v501, %v1411
        %v1415 = vmul.f32 %v502, %v1412
        %v1416 = vsub.f32 %v1309, %v1363
        %v1417 = vsub.f32 %v1323, %v1363
        %v1418 = vsub.f32 %v1337, %v1363
        %v1419 = vsub.f32 %v1311, %v1364
        %v1420 = vsub.f32 %v1325, %v1364
        %v1421 = vsub.f32 %v1339, %v1364
        %v1422 = vstv %s1391
        %v1423 = vsub.f32 %v1416, %v1422
        %v1424 = vsub.f32 %v1417, %v1422
        %v1425 = vsub.f32 %v1418, %v1422
        %v1426 = vsub.f32 %v1419, %v1422
        %v1427 = vsub.f32 %v1420, %v1422
        %v1428 = vsub.f32 %v1421, %v1422
        %v1429 = vsel %vm803, %v1423, 0.0
        %v1430 = vsel %vm804, %v1424, 0.0
        %v1431 = vsel %vm805, %v1425, 0.0
        %v1432 = vsel %vm803, %v1426, 0.0
        %v1433 = vsel %vm804, %v1427, 0.0
        %v1434 = vsel %vm805, %v1428, 0.0
        %v1435 = vmul.f32 %v1429, 1.442695
        %v1436 = vpow.pop %v1435
        %v1437 = vmul.f32 %v1430, 1.442695
        %v1438 = vpow.pop %v1437
        %v1439 = vmul.f32 %v1431, 1.442695
        %v1440 = vpow.pop %v1439
        %v1441 = vmul.f32 %v1432, 1.442695
        %v1442 = vpow.pop %v1441
        %v1443 = vmul.f32 %v1433, 1.442695
        %v1444 = vpow.pop %v1443
        %v1445 = vmul.f32 %v1434, 1.442695
        %v1446 = vpow.pop %v1445
        %v1447 = vadd.f32 %v1436, 0.0001
        %v1448 = vadd.f32 %v1438, 0.0001
        %v1449 = vadd.f32 %v1440, 0.0001
        %v1450 = vadd.f32 %v1442, 0.0001
        %v1451 = vadd.f32 %v1444, 0.0001
        %v1452 = vadd.f32 %v1446, 0.0001
        %v1453 = vmul.f32 %v1447, 0.061313935
        %v1454 = vmul.f32 %v1448, 0.061313935
        %v1455 = vmul.f32 %v1449, 0.061313935
        %v1456 = vmul.f32 %v1450, 0.061313935
        %v1457 = vmul.f32 %v1451, 0.061313935
        %v1458 = vmul.f32 %v1452, 0.061313935
        %v1459 = vmul.f32 %v500, %v1453
        %v1460 = vmul.f32 %v501, %v1454
        %v1461 = vmul.f32 %v502, %v1455
        %v1462 = vmul.f32 %v500, %v1456
        %v1463 = vmul.f32 %v501, %v1457
        %v1464 = vmul.f32 %v502, %v1458
        %v1465 = vadd.f32 %v1459, %v1462
        %v1466 = vrot.slane %v1465, 4
        %v1467 = vadd.f32 %v1465, %v1466
        %v1468 = vrot.slane %v1467, 2
        %v1469 = vadd.f32 %v1467, %v1468
        %v1470 = vrot.slane %v1469, 1
        %v1471 = vadd.f32 %v1469, %v1470
        %v1472 = vadd.f32 %v1460, %v1463
        %v1473 = vrot.slane %v1472, 4
        %v1474 = vadd.f32 %v1472, %v1473
        %v1475 = vrot.slane %v1474, 2
        %v1476 = vadd.f32 %v1474, %v1475
        %v1477 = vrot.slane %v1476, 1
        %v1478 = vadd.f32 %v1476, %v1477
        %v1479 = vadd.f32 %v1461, %v1464
        %v1480 = vrot.slane %v1479, 4
        %v1481 = vadd.f32 %v1479, %v1480
        %v1482 = vrot.slane %v1481, 2
        %v1483 = vadd.f32 %v1481, %v1482
        %v1484 = vrot.slane %v1483, 1
        %v1485 = vadd.f32 %v1483, %v1484
        %v1486 = vmul.f32 %v1413, %v1471
        %v1487 = vmul.f32 %v1414, %v1478
        %v1488 = vmul.f32 %v1415, %v1485
        %v1489 = vadd.f32 %v1486, %v1487
        %v1490 = vadd.f32 %v1489, %v1488
        %1491 = vadd.xlane.f32.xlu0 %v1490
        %v1492 = vpop.xlane.xlu0 %1491
        %v1493 = vrcp.pop %v1492
        %v1494 = vpack.c.bf16 %v1462, %v1459
        %v1495 = vpack.c.bf16 %v1463, %v1460
        %v1496 = vpack.c.bf16 %v1464, %v1461
        %1497 = vxpose.binary.xlu0.c.b16.start [1/16] %v1495, %v1494, 128
        %1498 = vxpose.binary.xlu0.c.b16.cont [2/16] 0, 0, 128
        %1499 = vxpose.binary.xlu0.c.b16.cont [3/16] 0, 0, 128
        %1500 = vxpose.binary.xlu0.c.b16.cont [4/16] 0, 0, 128
        %1501 = vxpose.binary.xlu0.c.b16.cont [5/16] 0, 0, 128
        %1502 = vxpose.binary.xlu0.c.b16.cont [6/16] 0, 0, 128
        %1503 = vxpose.binary.xlu0.c.b16.cont [7/16] 0, 0, 128
        %1504 = vxpose.binary.xlu0.c.b16.end [8/16] 0, 0, 128
        %v1505 = vpop.trf.xlu0
        %v1506 = vpop.trf.xlu0
        %v1507 = vpop.trf.xlu0
        %v1508 = vpop.trf.xlu0
        %v1509 = vpop.trf.xlu0
        %v1510 = vpop.trf.xlu0
        %v1511 = vpop.trf.xlu0
        %v1512 = vpop.trf.xlu0
        %v1513 = vpop.trf.xlu0
        %v1514 = vpop.trf.xlu0
        %v1515 = vpop.trf.xlu0
        %v1516 = vpop.trf.xlu0
        %v1517 = vpop.trf.xlu0
        %v1518 = vpop.trf.xlu0
        %v1519 = vpop.trf.xlu0
        %v1520 = vpop.trf.xlu0
        %1521 = vxpose.xlu0.c.b16.start [1/8] %v1496, 128
        %1522 = vxpose.xlu0.c.b16.cont [2/8] 0, 128
        %1523 = vxpose.xlu0.c.b16.cont [3/8] 0, 128
        %1524 = vxpose.xlu0.c.b16.cont [4/8] 0, 128
        %1525 = vxpose.xlu0.c.b16.cont [5/8] 0, 128
        %1526 = vxpose.xlu0.c.b16.cont [6/8] 0, 128
        %1527 = vxpose.xlu0.c.b16.cont [7/8] 0, 128
        %1528 = vxpose.xlu0.c.b16.end [8/8] 0, 128
        %v1529 = vpop.trf.xlu0
        %v1530 = vpop.trf.xlu0
        %v1531 = vpop.trf.xlu0
        %v1532 = vpop.trf.xlu0
        %v1533 = vpop.trf.xlu0
        %v1534 = vpop.trf.xlu0
        %v1535 = vpop.trf.xlu0
        %v1536 = vpop.trf.xlu0
        %1538 = vrot.lane.b32.xlu0 %v938, 64
        %v1539 = vpop.permute.xlu0 %1538
        %v1542 = vsel %vm979, %v1505, 0
        %v1545 = vsel %vm979, %v1507, 0
        %v1548 = vsel %vm979, %v1509, 0
        %v1551 = vsel %vm979, %v1511, 0
        %v1554 = vsel %vm979, %v1513, 0
        %v1557 = vsel %vm979, %v1515, 0
        %v1560 = vsel %vm979, %v1517, 0
        %v1563 = vsel %vm979, %v1519, 0
        %v1566 = vsel %vm979, %v1506, 0
        %v1569 = vsel %vm979, %v1508, 0
        %v1572 = vsel %vm979, %v1510, 0
        %v1575 = vsel %vm979, %v1512, 0
        %v1578 = vsel %vm979, %v1514, 0
        %v1581 = vsel %vm979, %v1516, 0
        %v1584 = vsel %vm979, %v1518, 0
        %v1587 = vsel %vm979, %v1520, 0
        %v1590 = vsel %vm979, %v1529, 0
        %v1593 = vsel %vm979, %v1530, 0
        %v1596 = vsel %vm979, %v1531, 0
        %v1599 = vsel %vm979, %v1532, 0
        %v1602 = vsel %vm979, %v1533, 0
        %v1605 = vsel %vm979, %v1534, 0
        %v1608 = vsel %vm979, %v1535, 0
        %v1611 = vsel %vm979, %v1536, 0
        %1613 = vmatpush.bf16.msra.mxu0 0
        %1614 = vmatpush.bf16.msra.mxu0 0
        %1615 = vmatpush.bf16.msra.mxu0 0
        %1616 = vmatpush.bf16.msra.mxu0 0
        %1617 = vmatpush.bf16.msra.mxu0 0
        %1618 = vmatpush.bf16.msra.mxu0 0
        %1619 = vmatpush.bf16.msra.mxu0 0
        %1620 = vmatpush.bf16.msra.mxu0 %v1539
        %1621 = vmatmul.bf16.gmra.mxu0 %v1542
        %v1622 = vpop.f32.mrf.mxu0
        %v1623 = vadd.f32 0.0, %v1622
        %v1624 = vpop.f32.mrf.mxu0
        %v1625 = vadd.f32 0.0, %v1624
        %1626 = vmatmul.bf16.gmra.mxu0 %v1545
        %v1627 = vpop.f32.mrf.mxu0
        %v1628 = vadd.f32 0.0, %v1627
        %v1629 = vpop.f32.mrf.mxu0
        %v1630 = vadd.f32 0.0, %v1629
        %1631 = vmatmul.bf16.gmra.mxu0 %v1548
        %v1632 = vpop.f32.mrf.mxu0
        %v1633 = vadd.f32 0.0, %v1632
        %v1634 = vpop.f32.mrf.mxu0
        %v1635 = vadd.f32 0.0, %v1634
        %1636 = vmatmul.bf16.gmra.mxu0 %v1551
        %v1637 = vpop.f32.mrf.mxu0
        %v1638 = vadd.f32 0.0, %v1637
        %v1639 = vpop.f32.mrf.mxu0
        %v1640 = vadd.f32 0.0, %v1639
        %1641 = vmatmul.bf16.gmra.mxu0 %v1554
        %v1642 = vpop.f32.mrf.mxu0
        %v1643 = vadd.f32 0.0, %v1642
        %v1644 = vpop.f32.mrf.mxu0
        %v1645 = vadd.f32 0.0, %v1644
        %1646 = vmatmul.bf16.gmra.mxu0 %v1557
        %v1647 = vpop.f32.mrf.mxu0
        %v1648 = vadd.f32 0.0, %v1647
        %v1649 = vpop.f32.mrf.mxu0
        %v1650 = vadd.f32 0.0, %v1649
        %1651 = vmatmul.bf16.gmra.mxu0 %v1560
        %v1652 = vpop.f32.mrf.mxu0
        %v1653 = vadd.f32 0.0, %v1652
        %v1654 = vpop.f32.mrf.mxu0
        %v1655 = vadd.f32 0.0, %v1654
        %1656 = vmatmul.bf16.gmra.mxu0 %v1563
        %v1657 = vpop.f32.mrf.mxu0
        %v1658 = vadd.f32 0.0, %v1657
        %v1659 = vpop.f32.mrf.mxu0
        %v1660 = vadd.f32 0.0, %v1659
        %1661 = vmatmul.bf16.gmra.mxu0 %v1566
        %v1662 = vpop.f32.mrf.mxu0
        %v1663 = vadd.f32 0.0, %v1662
        %v1664 = vpop.f32.mrf.mxu0
        %v1665 = vadd.f32 0.0, %v1664
        %1666 = vmatmul.bf16.gmra.mxu0 %v1569
        %v1667 = vpop.f32.mrf.mxu0
        %v1668 = vadd.f32 0.0, %v1667
        %v1669 = vpop.f32.mrf.mxu0
        %v1670 = vadd.f32 0.0, %v1669
        %1671 = vmatmul.bf16.gmra.mxu0 %v1572
        %v1672 = vpop.f32.mrf.mxu0
        %v1673 = vadd.f32 0.0, %v1672
        %v1674 = vpop.f32.mrf.mxu0
        %v1675 = vadd.f32 0.0, %v1674
        %1676 = vmatmul.bf16.gmra.mxu0 %v1575
        %v1677 = vpop.f32.mrf.mxu0
        %v1678 = vadd.f32 0.0, %v1677
        %v1679 = vpop.f32.mrf.mxu0
        %v1680 = vadd.f32 0.0, %v1679
        %1681 = vmatmul.bf16.gmra.mxu0 %v1578
        %v1682 = vpop.f32.mrf.mxu0
        %v1683 = vadd.f32 0.0, %v1682
        %v1684 = vpop.f32.mrf.mxu0
        %v1685 = vadd.f32 0.0, %v1684
        %1686 = vmatmul.bf16.gmra.mxu0 %v1581
        %v1687 = vpop.f32.mrf.mxu0
        %v1688 = vadd.f32 0.0, %v1687
        %v1689 = vpop.f32.mrf.mxu0
        %v1690 = vadd.f32 0.0, %v1689
        %1691 = vmatmul.bf16.gmra.mxu0 %v1584
        %v1692 = vpop.f32.mrf.mxu0
        %v1693 = vadd.f32 0.0, %v1692
        %v1694 = vpop.f32.mrf.mxu0
        %v1695 = vadd.f32 0.0, %v1694
        %1696 = vmatmul.bf16.gmra.mxu0 %v1587
        %v1697 = vpop.f32.mrf.mxu0
        %v1698 = vadd.f32 0.0, %v1697
        %v1699 = vpop.f32.mrf.mxu0
        %v1700 = vadd.f32 0.0, %v1699
        %1701 = vmatmul.bf16.gmra.mxu0 %v1590
        %v1702 = vpop.f32.mrf.mxu0
        %v1703 = vadd.f32 0.0, %v1702
        %v1704 = vpop.f32.mrf.mxu0
        %v1705 = vadd.f32 0.0, %v1704
        %1706 = vmatmul.bf16.gmra.mxu0 %v1593
        %v1707 = vpop.f32.mrf.mxu0
        %v1708 = vadd.f32 0.0, %v1707
        %v1709 = vpop.f32.mrf.mxu0
        %v1710 = vadd.f32 0.0, %v1709
        %1711 = vmatmul.bf16.gmra.mxu0 %v1596
        %v1712 = vpop.f32.mrf.mxu0
        %v1713 = vadd.f32 0.0, %v1712
        %v1714 = vpop.f32.mrf.mxu0
        %v1715 = vadd.f32 0.0, %v1714
        %1716 = vmatmul.bf16.gmra.mxu0 %v1599
        %v1717 = vpop.f32.mrf.mxu0
        %v1718 = vadd.f32 0.0, %v1717
        %v1719 = vpop.f32.mrf.mxu0
        %v1720 = vadd.f32 0.0, %v1719
        %1721 = vmatmul.bf16.gmra.mxu0 %v1602
        %v1722 = vpop.f32.mrf.mxu0
        %v1723 = vadd.f32 0.0, %v1722
        %v1724 = vpop.f32.mrf.mxu0
        %v1725 = vadd.f32 0.0, %v1724
        %1726 = vmatmul.bf16.gmra.mxu0 %v1605
        %v1727 = vpop.f32.mrf.mxu0
        %v1728 = vadd.f32 0.0, %v1727
        %v1729 = vpop.f32.mrf.mxu0
        %v1730 = vadd.f32 0.0, %v1729
        %1731 = vmatmul.bf16.gmra.mxu0 %v1608
        %v1732 = vpop.f32.mrf.mxu0
        %v1733 = vadd.f32 0.0, %v1732
        %v1734 = vpop.f32.mrf.mxu0
        %v1735 = vadd.f32 0.0, %v1734
        %1736 = vmatmul.bf16.gmra.mxu0 %v1611
        %v1737 = vpop.f32.mrf.mxu0
        %v1738 = vadd.f32 0.0, %v1737
        %v1739 = vpop.f32.mrf.mxu0
        %v1740 = vadd.f32 0.0, %v1739
        %1741 = vdwg.mxu0
        %v1742 = vpack.c.bf16 %v1413, %v1413
        %v1743 = vpack.c.bf16 %v1414, %v1414
        %v1744 = vpack.c.bf16 %v1415, %v1415
        %v1745 = vpack.c.bf16 %v1625, %v1623
        %v1746 = vpack.c.bf16 %v1630, %v1628
        %v1747 = vpack.c.bf16 %v1635, %v1633
        %v1748 = vpack.c.bf16 %v1640, %v1638
        %v1749 = vpack.c.bf16 %v1645, %v1643
        %v1750 = vpack.c.bf16 %v1650, %v1648
        %v1751 = vpack.c.bf16 %v1655, %v1653
        %v1752 = vpack.c.bf16 %v1660, %v1658
        %v1753 = vpack.c.bf16 %v1665, %v1663
        %v1754 = vpack.c.bf16 %v1670, %v1668
        %v1755 = vpack.c.bf16 %v1675, %v1673
        %v1756 = vpack.c.bf16 %v1680, %v1678
        %v1757 = vpack.c.bf16 %v1685, %v1683
        %v1758 = vpack.c.bf16 %v1690, %v1688
        %v1759 = vpack.c.bf16 %v1695, %v1693
        %v1760 = vpack.c.bf16 %v1700, %v1698
        %v1761 = vpack.c.bf16 %v1705, %v1703
        %v1762 = vpack.c.bf16 %v1710, %v1708
        %v1763 = vpack.c.bf16 %v1715, %v1713
        %v1764 = vpack.c.bf16 %v1720, %v1718
        %v1765 = vpack.c.bf16 %v1725, %v1723
        %v1766 = vpack.c.bf16 %v1730, %v1728
        %v1767 = vpack.c.bf16 %v1735, %v1733
        %v1768 = vpack.c.bf16 %v1740, %v1738
        %1769 = vmatpush.bf16.msra.mxu0 %v1752
        %1770 = vmatpush.bf16.msra.mxu0 %v1751
        %1771 = vmatpush.bf16.msra.mxu0 %v1750
        %1772 = vmatpush.bf16.msra.mxu0 %v1749
        %1773 = vmatpush.bf16.msra.mxu0 %v1748
        %1774 = vmatpush.bf16.msra.mxu0 %v1747
        %1775 = vmatpush.bf16.msra.mxu0 %v1746
        %1776 = vmatpush.bf16.msra.mxu0 %v1745
        %1777 = vmatmul.bf16.gmra.mxu0 %v1742
        %v1778 = vpop.f32.mrf.mxu0
        %v1779 = vadd.f32 0.0, %v1778
        %v1780 = vpop.f32.mrf.mxu0
        %1781 = vdwg.mxu0
        %1782 = vmatpush.bf16.msra.mxu0 %v1760
        %1783 = vmatpush.bf16.msra.mxu0 %v1759
        %1784 = vmatpush.bf16.msra.mxu0 %v1758
        %1785 = vmatpush.bf16.msra.mxu0 %v1757
        %1786 = vmatpush.bf16.msra.mxu0 %v1756
        %1787 = vmatpush.bf16.msra.mxu0 %v1755
        %1788 = vmatpush.bf16.msra.mxu0 %v1754
        %1789 = vmatpush.bf16.msra.mxu0 %v1753
        %1790 = vmatmul.bf16.gmra.mxu0 %v1743
        %v1791 = vpop.f32.mrf.mxu0
        %v1792 = vadd.f32 %v1779, %v1791
        %v1793 = vpop.f32.mrf.mxu0
        %1794 = vdwg.mxu0
        %1795 = vmatpush.bf16.msra.mxu0 %v1768
        %1796 = vmatpush.bf16.msra.mxu0 %v1767
        %1797 = vmatpush.bf16.msra.mxu0 %v1766
        %1798 = vmatpush.bf16.msra.mxu0 %v1765
        %1799 = vmatpush.bf16.msra.mxu0 %v1764
        %1800 = vmatpush.bf16.msra.mxu0 %v1763
        %1801 = vmatpush.bf16.msra.mxu0 %v1762
        %1802 = vmatpush.bf16.msra.mxu0 %v1761
        %1803 = vmatmul.bf16.gmra.mxu0 %v1744
        %v1804 = vpop.f32.mrf.mxu0
        %v1805 = vadd.f32 %v1792, %v1804
        %v1806 = vpop.f32.mrf.mxu0
        %1807 = vdwg.mxu0
        %v1808 = vmul.f32 %v1805, %v1493
        %1810 = vrot.lane.b32.xlu0 %v1808, 64
        %v1811 = vpop.permute.xlu0 %1810
        %v1813 = vsel %vm625, %v1247, %v1811
        %v1814 = vpack.c.bf16 %v1813, %v1813
        %v1815 = vld [vmem:[%s5] sm:$0xf]
        %v1816 = vld [vmem:[%s5 + $0x4] sm:$0xf]
        %v1817 = vld [vmem:[%s5 + $0x8] sm:$0xf]
        %v1818 = vld [vmem:[%s5 + $0xc] sm:$0xf]
        %v1819 = vld [vmem:[%s5 + $0x10] sm:$0xf]
        %v1820 = vld [vmem:[%s5 + $0x14] sm:$0xf]
        %v1821 = vld [vmem:[%s5 + $0x18] sm:$0xf]
        %v1822 = vld [vmem:[%s5 + $0x1c] sm:$0xf]
        %v1823 = vld [vmem:[%s5 + $0x20] sm:$0xf]
        %v1824 = vld [vmem:[%s5 + $0x24] sm:$0xf]
        %v1825 = vld [vmem:[%s5 + $0x28] sm:$0xf]
        %v1826 = vld [vmem:[%s5 + $0x2c] sm:$0xf]
        %v1827 = vld [vmem:[%s5 + $0x30] sm:$0xf]
        %v1828 = vld [vmem:[%s5 + $0x34] sm:$0xf]
        %v1829 = vld [vmem:[%s5 + $0x38] sm:$0xf]
        %v1830 = vld [vmem:[%s5 + $0x3c] sm:$0xf]
        %v1831 = vld [vmem:[%s6] sm:$0x1]
        %v1833 = vperm.slane %v1831, 0
        %v1851 = vunpack.c.l.b16 %v1815
        %v1852 = vunpack.c.l.b16 %v1816
        %v1853 = vunpack.c.l.b16 %v1817
        %v1854 = vunpack.c.l.b16 %v1818
        %v1855 = vunpack.c.l.b16 %v1819
        %v1856 = vunpack.c.l.b16 %v1820
        %v1857 = vunpack.c.l.b16 %v1821
        %v1858 = vunpack.c.l.b16 %v1822
        %v1859 = vunpack.c.l.b16 %v1823
        %v1860 = vunpack.c.l.b16 %v1824
        %v1861 = vunpack.c.l.b16 %v1825
        %v1862 = vunpack.c.l.b16 %v1826
        %v1863 = vunpack.c.l.b16 %v1827
        %v1864 = vunpack.c.l.b16 %v1828
        %v1865 = vunpack.c.l.b16 %v1829
        %v1866 = vunpack.c.l.b16 %v1830
        %v1867 = vpack.c.b16 %v1852, %v1851
        %v1868 = vpack.c.b16 %v1854, %v1853
        %v1869 = vpack.c.b16 %v1856, %v1855
        %v1870 = vpack.c.b16 %v1858, %v1857
        %v1871 = vpack.c.b16 %v1860, %v1859
        %v1872 = vpack.c.b16 %v1862, %v1861
        %v1873 = vpack.c.b16 %v1864, %v1863
        %v1874 = vpack.c.b16 %v1866, %v1865
        %1883 = vmatpush.bf16.msra.mxu0 %v1874
        %1884 = vmatpush.bf16.msra.mxu0 %v1873
        %1885 = vmatpush.bf16.msra.mxu0 %v1872
        %1886 = vmatpush.bf16.msra.mxu0 %v1871
        %1887 = vmatpush.bf16.msra.mxu0 %v1870
        %1888 = vmatpush.bf16.msra.mxu0 %v1869
        %1889 = vmatpush.bf16.msra.mxu0 %v1868
        %1890 = vmatpush.bf16.msra.mxu0 %v1867
        %1891 = vmatmul.bf16.gmra.mxu0 %v1814
        %v1892 = vpop.f32.mrf.mxu0
        %v1893 = vadd.f32 %v1833, %v1892
        %v1894 = vpop.f32.mrf.mxu0
        %1895 = vdwg.mxu0
        %v1896 = vadd.f32 %v349, %v1893
        %v1897 = vld [vmem:[%s7] sm:$0x1]
        %v1898 = vld [vmem:[%s8] sm:$0x1]
        %v1899 = vsel %vm421, %v1896, 0.0
        %1900 = vadd.xlane.f32.xlu0 %v1899
        %v1901 = vpop.xlane.xlu0 %1900
        %v1902 = vrcp.pop 32.0
        %v1903 = vmul.f32 32.0, %v1902
        %v1904 = vsub.f32 1.0, %v1903
        %v1905 = vmul.f32 %v1902, %v1904
        %v1906 = vadd.f32 %v1902, %v1905
        %vm1907 = vweird.f32 %v1902
        %v1908 = vsel %vm1907, %v1902, %v1906
        %v1909 = vmul.f32 %v1901, %v1908
        %v1910 = vsub.f32 %v1896, %v1909
        %v1911 = vmul.f32 %v1910, %v1910
        %v1912 = vsel %vm421, %v1911, 0.0
        %1913 = vadd.xlane.f32.xlu0 %v1912
        %v1914 = vpop.xlane.xlu0 %1913
        %v1915 = vmul.f32 %v1914, %v1908
        %v1916 = vadd.f32 %v1915, 1e-05
        %v1917 = vrsqrt.pop %v1916
        %v1918 = vmul.f32 %v1917, %v1916
        %v1919 = vmul.f32 %v1918, %v1917
        %v1920 = vmul.f32 0.5, %v1919
        %v1921 = vsub.f32 1.5, %v1920
        %v1922 = vmul.f32 %v1917, %v1921
        %vm1923 = vweird.f32 %v1916
        %vm1924 = vweird.f32 %v1917
        %vm1925 = vmor %vm1923, %vm1924
        %v1926 = vsel %vm1925, %v1917, %v1922
        %v1927 = vmul.f32 %v1910, %v1926
        %v1929 = vperm.slane %v1897, 0
        %v1931 = vmul.f32 %v1927, %v1929
        %v1933 = vperm.slane %v1898, 0
        %v1935 = vadd.f32 %v1931, %v1933
        %1936 = vst.msk [vmem:[%s338] sm:$0xff] %vm421, %v1935
        %s1937 = sand.u32 %s230, 1
        %s1938 = scalar_lea.sflag [#allocation3], %s1937
        %s1939 = sand.u32 %s230, 1
        %s1940 = smul.addr %s1939, 8
        %s1941 = scalar_lea.vmem [#allocation2], %s1940
        // Predicated region
        $region57: #{tpu_custom_call.1} parent=55 // pred_check
          %p1942 = pneg %p240
        $region58: #{tpu_custom_call.1} parent=55 // pred_check_branch
          %1944 = sbr.rel (%p1942) target = $region60
        $region59: #{tpu_custom_call.1} parent=55 // pred_region
          %1946 = vsyncadd %s1938, 0
          %s1947 = smul.addr %s23, 8
          %s1948 = scalar_lea.hbm %s9, %s1947
          %s1950 = sshll.u32 %s1941, 4
          %s1951 = int_to_ptr.vmem [resolvable:$true] %s1950
          %s1952 = sshll.u32 %s1948, 4
          %s1953 = int_to_ptr.hbm [resolvable:$true] %s1952
          %1955 = dma.vmem_to_hbm [thread:$0]  %s1951, 128, %s1953, %s1938
        $region60: #{tpu_custom_call.1} parent=55 // pred_fallthru
          _
      $region56: #{tpu_custom_call.1} parent=5 // pred_fallthru
        _
      %p1956 = scmp.le.s32.totalorder 2, %s18
      // Predicated region
      $region61: #{tpu_custom_call.1} parent=5 // pred_check
        %p1957 = pneg %p1956
      $region62: #{tpu_custom_call.1} parent=5 // pred_check_branch
        %1959 = sbr.rel (%p1957) target = $region64
      $region63: #{tpu_custom_call.1} parent=5 // pred_region
        %s1960 = ssub.s32 %s18, 2
        // Predicated region
        $region65: #{tpu_custom_call.1} parent=63 // pred_check
          %p1961 = pneg %p246
        $region66: #{tpu_custom_call.1} parent=63 // pred_check_branch
          %1963 = sbr.rel (%p1961) target = $region68
        $region67: #{tpu_custom_call.1} parent=63 // pred_region
          %s1964 = sand.u32 %s231, 1
          %s1965 = scalar_lea.sflag [#allocation3], %s1964
          %s1966 = sand.u32 %s231, 1
          %s1967 = smul.addr %s1966, 8
          %s1968 = scalar_lea.vmem [#allocation2], %s1967
          %1970 = dma.done %s1965, 128
        $region68: #{tpu_custom_call.1} parent=63 // pred_fallthru
          _
      $region64: #{tpu_custom_call.1} parent=5 // pred_fallthru
        _
    $region6: #{tpu_custom_call.1} parent=1 // loop_footer
      %s22 = sadd.s32 1, %s18
    $region7: #{tpu_custom_call.1} parent=1 // loop_footer_branch
      %17 = sbr.rel target = $region3
    $region8: #{tpu_custom_call.1} parent=1 // loop_exit
      _
    %1971 = vsyncpa [#allocation3], 1
    %s1972 = scalar_lea.sflag [#allocation3], 1
    %1973 = vsyncpa %s1972, 1

</llo_original>
